<compile_context>
chip_gen: v7x
topology: tpu7x:2x2x1
jax: 0.10.0
libtpu: 0.0.40
codegen_flags: <defaults>
</compile_context>

<pallas_src>
import jax
import jax.numpy as jnp
from jax.experimental import pallas as pl
from jax.experimental.pallas import tpu as pltpu

# ---- configuration (GraphModule(in_size, out_size, num_layers, num_proposals,
#      feat_size, num_locals, query_mode='corner', graph_mode='edge_conv',
#      graph_aggr='add', return_orientation=False)) ----
IN_SIZE = 32
OUT_SIZE = 32
FEAT_SIZE = 32
NUM_LAYERS = 2
NUM_PROPOSALS = 16
NUM_LOCALS = 4
NUM_BINS = 6
BATCH = 2
BIG = 1e30


# --------------------------------------------------------------------------
# Fused kernel: adjacency (== _create_adjacent_mat / _query_locals) followed by
# the stacked dense EdgeConv + residual (== _feed + new_obj_feats write).
#   adjacency[s, t] = 1  ==>  edge  s (source/query) -> t (target/neighbor)
#   message(s->t) = W2 @ relu(W1 @ [x_t, x_s - x_t] + b1) + b2 ; 'add' aggregation on t
# --------------------------------------------------------------------------
def _fused_kernel(corn_ref, ctr_ref, x_ref, mask_ref,
                  w1_ref, b1_ref, w2_ref, b2_ref,
                  adj_ref, out_ref):
    N = NUM_PROPOSALS
    H = OUT_SIZE

    # ---- pairwise squared corner->center distances (one tiny MXU matmul) ----
    # corn_ref: (8N, 8) rows [x, y, z, ||corner||^2, 1, 0, 0, 0], row = c*N + i
    # ctr_ref : (8, N)  rows [-2cx, -2cy, -2cz, 1, ||center||^2, 0, 0, 0]^T layout
    d2 = jnp.dot(corn_ref[0], ctr_ref[0], preferred_element_type=jnp.float32)  # (8N, N)

    # pc[i, j] = min_c ||corner[i, c] - center[j]||^2   (sqrt dropped: monotone)
    pc = d2[0:N, :]
    for c in range(1, 8):
        pc = jnp.minimum(pc, d2[c * N:(c + 1) * N, :])

    mask_row = mask_ref[0]                                        # (1, N)
    row_iota = jax.lax.broadcasted_iota(jnp.int32, (N, N), 0)
    col_iota = jax.lax.broadcasted_iota(jnp.int32, (N, N), 1)
    # invalid objects -> BIG ; self -> BIG (include_self=False in _create_adjacent_mat)
    pc = jnp.where(mask_row == 0.0, BIG, pc)
    pc = jnp.where(row_iota == col_iota, BIG, pc)

    # torch.topk(..., largest=False, k=num_locals) via unrolled masked argmin
    adj = jnp.zeros((N, N), dtype=jnp.float32)
    for _ in range(NUM_LOCALS):
        mn = jnp.min(pc, axis=1, keepdims=True)
        is_min = pc == mn
        first = jnp.min(jnp.where(is_min, col_iota, N), axis=1, keepdims=True)
        onehot = col_iota == first
        adj = jnp.where(onehot, 1.0, adj)
        pc = jnp.where(onehot, BIG, pc)
    adj_ref[0] = adj

    # ---- EdgeConv stack (dense adjacency, 'add' aggregation) ----
    x = x_ref[0]                                                  # (N, C)
    mask_col = jnp.transpose(mask_row)                            # (N, 1)
    # restrict edges to valid nodes (== per-batch masked sub-graph build)
    a_eff = adj * mask_col * mask_row                             # (N_src, N_tgt)
    deg = jnp.transpose(jnp.sum(a_eff, axis=0, keepdims=True))    # (N_tgt, 1)

    feat = x
    for l in range(NUM_LAYERS):
        # merged first GEMM: w1_ref[l] is (C, 2H) = [W1_i | W1_d]
        z = jnp.dot(feat, w1_ref[l], preferred_element_type=jnp.float32)    # (N, 2H)
        ai = z[:, :H]                                             # x_t @ W1_i
        ad = z[:, H:]                                             # x   @ W1_d
        # hidden[s, t, :] = relu(x_t@W1_i + (x_s - x_t)@W1_d + b1)
        hidden = jnp.maximum(
            ai[None, :, :] + ad[:, None, :] - ad[None, :, :] + b1_ref[l][None, :, :],
            0.0)                                                  # (N_s, N_t, H)
        # linear aggregation hoisted before W2:
        #   feat[t] = (sum_s a[s,t]*hidden[s,t,:]) @ W2 + deg[t]*b2
        agg = jnp.sum(a_eff[:, :, None] * hidden, axis=0)         # (N_t, H)
        feat = (jnp.dot(agg, w2_ref[l], preferred_element_type=jnp.float32)
                + deg * b2_ref[l])                                # (N_t, H)

    # batch_obj_feats += node_feat ; scatter back only to masked-in nodes
    out_ref[0] = (mask_col * (x + feat)).astype(out_ref.dtype)


def run_fused(corn_aug, ctr_aug, x, mask3, w1c, b1, w2, b2):
    B, N, C = x.shape
    L = NUM_LAYERS
    H = OUT_SIZE
    return pl.pallas_call(
        _fused_kernel,
        out_shape=(
            jax.ShapeDtypeStruct((B, N, N), jnp.float32),   # adjacent_mat
            jax.ShapeDtypeStruct((B, N, C), jnp.float32),   # new bbox_feature
        ),
        grid_spec=pltpu.PrefetchScalarGridSpec(
            num_scalar_prefetch=0,
            grid=(B,),
            in_specs=[
                pl.BlockSpec((1, 8 * N, 8), lambda b: (b, 0, 0)),
                pl.BlockSpec((1, 8, N), lambda b: (b, 0, 0)),
                pl.BlockSpec((1, N, C), lambda b: (b, 0, 0)),
                pl.BlockSpec((1, 1, N), lambda b: (b, 0, 0)),
                pl.BlockSpec((L, C, 2 * H), lambda b: (0, 0, 0)),
                pl.BlockSpec((L, 1, H), lambda b: (0, 0, 0)),
                pl.BlockSpec((L, H, H), lambda b: (0, 0, 0)),
                pl.BlockSpec((L, 1, H), lambda b: (0, 0, 0)),
            ],
            out_specs=[
                pl.BlockSpec((1, N, N), lambda b: (b, 0, 0)),
                pl.BlockSpec((1, N, C), lambda b: (b, 0, 0)),
            ],
        ),
        compiler_params=pltpu.CompilerParams(dimension_semantics=("parallel",)),
    )(corn_aug, ctr_aug, x, mask3, w1c, b1, w2, b2)


# --------------------------------------------------------------------------
# Parameter init (EdgeConv.map_edge = Linear(2C,H) -> ReLU -> Linear(H,H)), L layers
# --------------------------------------------------------------------------
def init_params(key):
    w1s, b1s, w2s, b2s = [], [], [], []
    keys = jax.random.split(key, 4 * NUM_LAYERS)
    for l in range(NUM_LAYERS):
        k1, k2, k3, k4 = keys[4 * l:4 * l + 4]
        lim1 = 1.0 / (2 * IN_SIZE) ** 0.5
        lim2 = 1.0 / OUT_SIZE ** 0.5
        w1s.append(jax.random.uniform(k1, (2 * IN_SIZE, OUT_SIZE), jnp.float32, -lim1, lim1))
        b1s.append(jax.random.uniform(k2, (1, OUT_SIZE), jnp.float32, -lim1, lim1))
        w2s.append(jax.random.uniform(k3, (OUT_SIZE, OUT_SIZE), jnp.float32, -lim2, lim2))
        b2s.append(jax.random.uniform(k4, (1, OUT_SIZE), jnp.float32, -lim2, lim2))
    return jnp.stack(w1s), jnp.stack(b1s), jnp.stack(w2s), jnp.stack(b2s)


# --------------------------------------------------------------------------
# GraphModule.forward
# --------------------------------------------------------------------------
def graph_module_forward(data_dict, params):
    obj_feats = data_dict["bbox_feature"].astype(jnp.float32)     # (B, N, C)
    object_masks = data_dict["bbox_mask"].astype(jnp.float32)     # (B, N)
    corners = data_dict["bbox_corner"].astype(jnp.float32)        # (B, N, 8, 3)
    B, N, C = obj_feats.shape
    w1, b1, w2, b2 = params

    # --- cheap XLA-side layout prep (no 3-lane tensors inside the kernel) ---
    centers = 0.5 * (corners.min(axis=2) + corners.max(axis=2))               # (B, N, 3)
    corn_flat = corners.transpose(0, 2, 1, 3).reshape(B, 8 * N, 3)            # row = c*N+i
    corn_sq = jnp.sum(corn_flat * corn_flat, axis=-1, keepdims=True)          # (B, 8N, 1)
    corn_aug = jnp.concatenate(
        [corn_flat, corn_sq, jnp.ones((B, 8 * N, 1), jnp.float32),
         jnp.zeros((B, 8 * N, 3), jnp.float32)], axis=-1)                     # (B, 8N, 8)
    ctr_sq = jnp.sum(centers * centers, axis=-1, keepdims=True)               # (B, N, 1)
    ctr_aug = jnp.concatenate(
        [-2.0 * centers, jnp.ones((B, N, 1), jnp.float32), ctr_sq,
         jnp.zeros((B, N, 3), jnp.float32)], axis=-1).transpose(0, 2, 1)      # (B, 8, N)
    mask3 = object_masks.reshape(B, 1, N)

    # merged first-layer weights: (L, 2C, H) -> (L, C, 2H) = [W1_i | W1_d]
    w1c = jnp.concatenate([w1[:, :C, :], w1[:, C:, :]], axis=-1)

    adjacent_mat, new_obj_feats = run_fused(
        corn_aug, ctr_aug, obj_feats, mask3, w1c, b1, w2, b2)

    out = dict(data_dict)
    out["bbox_feature"] = new_obj_feats
    out["adjacent_mat"] = adjacent_mat
    # return_orientation=False => these buffers stay zero (matches the reference module)
    out["edge_index"] = jnp.zeros((B, 2, N * NUM_LOCALS), jnp.float32)
    out["edge_feature"] = jnp.zeros((B, N, NUM_LOCALS, OUT_SIZE), jnp.float32)
    out["num_edge_source"] = jnp.zeros((B,), jnp.int32)
    out["num_edge_target"] = jnp.zeros((B,), jnp.int32)
    out["edge_orientations"] = jnp.zeros((B, N * NUM_LOCALS, NUM_BINS), jnp.float32)
    out["edge_distances"] = jnp.zeros((B, N * NUM_LOCALS), jnp.float32)
    return out


# --------------------------------------------------------------------------
# Pure-JAX reference (original formulation: direct diffs, un-hoisted W2) for check
# --------------------------------------------------------------------------
def reference(obj_feats, corners, mask, params):
    w1, b1, w2, b2 = params
    B, N, C = obj_feats.shape
    centers = 0.5 * (corners.min(axis=2) + corners.max(axis=2))                 # (B,N,3)
    diff = corners[:, :, :, None, :] - centers[:, None, None, :, :]             # (B,N,8,N,3)
    pc = jnp.sum(diff ** 2, -1).min(axis=2)                                     # (B,N,N) squared
    pc = jnp.where(mask[:, None, :] == 0, BIG, pc)
    pc = jnp.where(jnp.eye(N, dtype=bool)[None], BIG, pc)
    col = jnp.arange(N)[None, None, :]
    adj = jnp.zeros((B, N, N), jnp.float32)
    for _ in range(NUM_LOCALS):
        mn = pc.min(axis=-1, keepdims=True)
        first = jnp.min(jnp.where(pc == mn, col, N), axis=-1, keepdims=True)
        onehot = col == first
        adj = jnp.where(onehot, 1.0, adj)
        pc = jnp.where(onehot, BIG, pc)
    a_eff = adj * mask[:, :, None] * mask[:, None, :]
    feat = obj_feats
    for l in range(NUM_LAYERS):
        ai = feat @ w1[l][:C]
        ad = feat @ w1[l][C:]
        hidden = jax.nn.relu(ai[:, None, :, :] + ad[:, :, None, :] - ad[:, None, :, :]
                             + b1[l][None])
        msg = hidden @ w2[l] + b2[l][None]
        feat = jnp.sum(a_eff[..., None] * msg, axis=1)
    return adj, mask[..., None] * (obj_feats + feat)


if __name__ == "__main__":
    key = jax.random.PRNGKey(0)
    k1, k2, k3, kp = jax.random.split(key, 4)

    obj_feats = jax.random.normal(k1, (BATCH, NUM_PROPOSALS, IN_SIZE), jnp.float32)
    base = jax.random.uniform(k2, (BATCH, NUM_PROPOSALS, 1, 3), minval=-5.0, maxval=5.0)
    half = jax.random.uniform(k3, (BATCH, NUM_PROPOSALS, 1, 3), minval=0.2, maxval=1.0)
    signs = jnp.array([[sx, sy, sz] for sx in (-1.0, 1.0)
                       for sy in (-1.0, 1.0) for sz in (-1.0, 1.0)], jnp.float32)
    corners = base + half * signs[None, None]                    # (B, N, 8, 3)
    bbox_mask = jnp.concatenate(
        [jnp.ones((1, NUM_PROPOSALS)),
         jnp.concatenate([jnp.ones((1, 12)), jnp.zeros((1, 4))], axis=1)],
        axis=0).astype(jnp.float32)                              # (B, N)

    params = init_params(kp)
    data_dict = {"bbox_feature": obj_feats, "bbox_mask": bbox_mask, "bbox_corner": corners}

    out = graph_module_forward(data_dict, params)
    jax.block_until_ready(out["bbox_feature"])
    jax.block_until_ready(out["adjacent_mat"])

    ref_adj, ref_feats = reference(obj_feats, corners, bbox_mask, params)
    assert jnp.allclose(out["adjacent_mat"], ref_adj), "adjacency mismatch"
    assert jnp.allclose(out["bbox_feature"], ref_feats, rtol=1e-4, atol=1e-4), "feature mismatch"

    print("KERNEL_OK")
</pallas_src>

<mosaic_0001>
module attributes {stable_mosaic.version = 11 : i64} {
  func.func @_fused_kernel(%arg0: i32, %arg1: memref<1x128x8xf32, #tpu.memory_space<vmem>>, %arg2: memref<1x8x16xf32, #tpu.memory_space<vmem>>, %arg3: memref<1x16x32xf32, #tpu.memory_space<vmem>>, %arg4: memref<1x1x16xf32, #tpu.memory_space<vmem>>, %arg5: memref<2x32x64xf32, #tpu.memory_space<vmem>>, %arg6: memref<2x1x32xf32, #tpu.memory_space<vmem>>, %arg7: memref<2x32x32xf32, #tpu.memory_space<vmem>>, %arg8: memref<2x1x32xf32, #tpu.memory_space<vmem>>, %arg9: memref<1x16x16xf32, #tpu.memory_space<vmem>>, %arg10: memref<1x16x32xf32, #tpu.memory_space<vmem>>) attributes {dimension_semantics = [#tpu.dimension_semantics<parallel>], iteration_bounds = array<i64: 2>, scalar_prefetch = 0 : i64, scratch_operands = 0 : i64, tpu.core_type = #tpu.core_type<tc>, window_params = [{transform_indices = @transform_0, window_bounds = array<i64: 1, 128, 8>}, {transform_indices = @transform_1, window_bounds = array<i64: 1, 8, 16>}, {transform_indices = @transform_2, window_bounds = array<i64: 1, 16, 32>}, {transform_indices = @transform_3, window_bounds = array<i64: 1, 1, 16>}, {pipeline_mode = #tpu.pipeline_mode<synchronous>, transform_indices = @transform_4, window_bounds = array<i64: 2, 32, 64>}, {pipeline_mode = #tpu.pipeline_mode<synchronous>, transform_indices = @transform_5, window_bounds = array<i64: 2, 1, 32>}, {pipeline_mode = #tpu.pipeline_mode<synchronous>, transform_indices = @transform_6, window_bounds = array<i64: 2, 32, 32>}, {pipeline_mode = #tpu.pipeline_mode<synchronous>, transform_indices = @transform_7, window_bounds = array<i64: 2, 1, 32>}, {transform_indices = @transform_8, window_bounds = array<i64: 1, 16, 16>}, {transform_indices = @transform_9, window_bounds = array<i64: 1, 16, 32>}]} {
    %c0 = arith.constant 0 : index
    %c0_0 = arith.constant 0 : index
    %c0_1 = arith.constant 0 : index
    %0 = vector.load %arg1[%c0, %c0_0, %c0_1] : memref<1x128x8xf32, #tpu.memory_space<vmem>>, vector<1x128x8xf32>
    %1 = vector.shape_cast %0 : vector<1x128x8xf32> to vector<128x8xf32>
    %c0_2 = arith.constant 0 : index
    %c0_3 = arith.constant 0 : index
    %c0_4 = arith.constant 0 : index
    %2 = vector.load %arg2[%c0_2, %c0_3, %c0_4] : memref<1x8x16xf32, #tpu.memory_space<vmem>>, vector<1x8x16xf32>
    %3 = vector.shape_cast %2 : vector<1x8x16xf32> to vector<8x16xf32>
    %cst = arith.constant dense<0.000000e+00> : vector<128x16xf32>
    %4 = tpu.matmul %1, %3, %cst {dimension_numbers = #tpu.dot_dimension_numbers<[1], [0], [0], [1], [0, 0, 1, 1], [], []>} : vector<128x8xf32>, vector<8x16xf32>, vector<128x16xf32> -> vector<128x16xf32>
    %5 = vector.extract_strided_slice %4 {offsets = [0, 0], sizes = [16, 16], strides = [1, 1]} : vector<128x16xf32> to vector<16x16xf32>
    %6 = vector.extract_strided_slice %4 {offsets = [16, 0], sizes = [16, 16], strides = [1, 1]} : vector<128x16xf32> to vector<16x16xf32>
    %7 = arith.minimumf %5, %6 : vector<16x16xf32>
    %8 = vector.extract_strided_slice %4 {offsets = [32, 0], sizes = [16, 16], strides = [1, 1]} : vector<128x16xf32> to vector<16x16xf32>
    %9 = arith.minimumf %7, %8 : vector<16x16xf32>
    %10 = vector.extract_strided_slice %4 {offsets = [48, 0], sizes = [16, 16], strides = [1, 1]} : vector<128x16xf32> to vector<16x16xf32>
    %11 = arith.minimumf %9, %10 : vector<16x16xf32>
    %12 = vector.extract_strided_slice %4 {offsets = [64, 0], sizes = [16, 16], strides = [1, 1]} : vector<128x16xf32> to vector<16x16xf32>
    %13 = arith.minimumf %11, %12 : vector<16x16xf32>
    %14 = vector.extract_strided_slice %4 {offsets = [80, 0], sizes = [16, 16], strides = [1, 1]} : vector<128x16xf32> to vector<16x16xf32>
    %15 = arith.minimumf %13, %14 : vector<16x16xf32>
    %16 = vector.extract_strided_slice %4 {offsets = [96, 0], sizes = [16, 16], strides = [1, 1]} : vector<128x16xf32> to vector<16x16xf32>
    %17 = arith.minimumf %15, %16 : vector<16x16xf32>
    %18 = vector.extract_strided_slice %4 {offsets = [112, 0], sizes = [16, 16], strides = [1, 1]} : vector<128x16xf32> to vector<16x16xf32>
    %19 = arith.minimumf %17, %18 : vector<16x16xf32>
    %c0_5 = arith.constant 0 : index
    %c0_6 = arith.constant 0 : index
    %c0_7 = arith.constant 0 : index
    %20 = vector.load %arg4[%c0_5, %c0_6, %c0_7] : memref<1x1x16xf32, #tpu.memory_space<vmem>>, vector<1x1x16xf32>
    %21 = vector.shape_cast %20 : vector<1x1x16xf32> to vector<1x16xf32>
    %22 = tpu.iota {dimensions = array<i32: 0>} : vector<16x16xi32>
    %23 = tpu.iota {dimensions = array<i32: 1>} : vector<16x16xi32>
    %cst_8 = arith.constant 0.000000e+00 : f32
    %24 = vector.broadcast %cst_8 : f32 to vector<1x16xf32>
    %25 = arith.cmpf oeq, %21, %24 : vector<1x16xf32>
    %cst_9 = arith.constant 1.000000e+30 : f32
    %26 = vector.shape_cast %25 : vector<1x16xi1> to vector<1x16xi1>
    %27 = vector.broadcast %26 : vector<1x16xi1> to vector<16x16xi1>
    %28 = vector.broadcast %cst_9 : f32 to vector<16x16xf32>
    %29 = arith.select %27, %28, %19 : vector<16x16xi1>, vector<16x16xf32>
    %30 = arith.cmpi eq, %22, %23 : vector<16x16xi32>
    %cst_10 = arith.constant 1.000000e+30 : f32
    %31 = vector.broadcast %cst_10 : f32 to vector<16x16xf32>
    %32 = arith.select %30, %31, %29 : vector<16x16xi1>, vector<16x16xf32>
    %cst_11 = arith.constant 0.000000e+00 : f32
    %33 = vector.broadcast %cst_11 : f32 to vector<16x16xf32>
    %cst_12 = arith.constant dense<0x7F800000> : vector<16xf32>
    %34 = vector.multi_reduction <minimumf>, %32, %cst_12 [1] : vector<16x16xf32> to vector<16xf32>
    %35 = vector.shape_cast %34 : vector<16xf32> to vector<16x1xf32>
    %36 = vector.broadcast %35 : vector<16x1xf32> to vector<16x16xf32>
    %37 = arith.cmpf oeq, %32, %36 : vector<16x16xf32>
    %c16_i32 = arith.constant 16 : i32
    %38 = vector.broadcast %c16_i32 : i32 to vector<16x16xi32>
    %39 = arith.select %37, %23, %38 : vector<16x16xi1>, vector<16x16xi32>
    %cst_13 = arith.constant dense<2147483647> : vector<16xi32>
    %40 = vector.multi_reduction <minsi>, %39, %cst_13 [1] : vector<16x16xi32> to vector<16xi32>
    %41 = vector.shape_cast %40 : vector<16xi32> to vector<16x1xi32>
    %42 = vector.broadcast %41 : vector<16x1xi32> to vector<16x16xi32>
    %43 = arith.cmpi eq, %23, %42 : vector<16x16xi32>
    %cst_14 = arith.constant 1.000000e+00 : f32
    %44 = vector.broadcast %cst_14 : f32 to vector<16x16xf32>
    %45 = arith.select %43, %44, %33 : vector<16x16xi1>, vector<16x16xf32>
    %cst_15 = arith.constant 1.000000e+30 : f32
    %46 = vector.broadcast %cst_15 : f32 to vector<16x16xf32>
    %47 = arith.select %43, %46, %32 : vector<16x16xi1>, vector<16x16xf32>
    %cst_16 = arith.constant dense<0x7F800000> : vector<16xf32>
    %48 = vector.multi_reduction <minimumf>, %47, %cst_16 [1] : vector<16x16xf32> to vector<16xf32>
    %49 = vector.shape_cast %48 : vector<16xf32> to vector<16x1xf32>
    %50 = vector.broadcast %49 : vector<16x1xf32> to vector<16x16xf32>
    %51 = arith.cmpf oeq, %47, %50 : vector<16x16xf32>
    %c16_i32_17 = arith.constant 16 : i32
    %52 = vector.broadcast %c16_i32_17 : i32 to vector<16x16xi32>
    %53 = arith.select %51, %23, %52 : vector<16x16xi1>, vector<16x16xi32>
    %cst_18 = arith.constant dense<2147483647> : vector<16xi32>
    %54 = vector.multi_reduction <minsi>, %53, %cst_18 [1] : vector<16x16xi32> to vector<16xi32>
    %55 = vector.shape_cast %54 : vector<16xi32> to vector<16x1xi32>
    %56 = vector.broadcast %55 : vector<16x1xi32> to vector<16x16xi32>
    %57 = arith.cmpi eq, %23, %56 : vector<16x16xi32>
    %cst_19 = arith.constant 1.000000e+00 : f32
    %58 = vector.broadcast %cst_19 : f32 to vector<16x16xf32>
    %59 = arith.select %57, %58, %45 : vector<16x16xi1>, vector<16x16xf32>
    %cst_20 = arith.constant 1.000000e+30 : f32
    %60 = vector.broadcast %cst_20 : f32 to vector<16x16xf32>
    %61 = arith.select %57, %60, %47 : vector<16x16xi1>, vector<16x16xf32>
    %cst_21 = arith.constant dense<0x7F800000> : vector<16xf32>
    %62 = vector.multi_reduction <minimumf>, %61, %cst_21 [1] : vector<16x16xf32> to vector<16xf32>
    %63 = vector.shape_cast %62 : vector<16xf32> to vector<16x1xf32>
    %64 = vector.broadcast %63 : vector<16x1xf32> to vector<16x16xf32>
    %65 = arith.cmpf oeq, %61, %64 : vector<16x16xf32>
    %c16_i32_22 = arith.constant 16 : i32
    %66 = vector.broadcast %c16_i32_22 : i32 to vector<16x16xi32>
    %67 = arith.select %65, %23, %66 : vector<16x16xi1>, vector<16x16xi32>
    %cst_23 = arith.constant dense<2147483647> : vector<16xi32>
    %68 = vector.multi_reduction <minsi>, %67, %cst_23 [1] : vector<16x16xi32> to vector<16xi32>
    %69 = vector.shape_cast %68 : vector<16xi32> to vector<16x1xi32>
    %70 = vector.broadcast %69 : vector<16x1xi32> to vector<16x16xi32>
    %71 = arith.cmpi eq, %23, %70 : vector<16x16xi32>
    %cst_24 = arith.constant 1.000000e+00 : f32
    %72 = vector.broadcast %cst_24 : f32 to vector<16x16xf32>
    %73 = arith.select %71, %72, %59 : vector<16x16xi1>, vector<16x16xf32>
    %cst_25 = arith.constant 1.000000e+30 : f32
    %74 = vector.broadcast %cst_25 : f32 to vector<16x16xf32>
    %75 = arith.select %71, %74, %61 : vector<16x16xi1>, vector<16x16xf32>
    %cst_26 = arith.constant dense<0x7F800000> : vector<16xf32>
    %76 = vector.multi_reduction <minimumf>, %75, %cst_26 [1] : vector<16x16xf32> to vector<16xf32>
    %77 = vector.shape_cast %76 : vector<16xf32> to vector<16x1xf32>
    %78 = vector.broadcast %77 : vector<16x1xf32> to vector<16x16xf32>
    %79 = arith.cmpf oeq, %75, %78 : vector<16x16xf32>
    %c16_i32_27 = arith.constant 16 : i32
    %80 = vector.broadcast %c16_i32_27 : i32 to vector<16x16xi32>
    %81 = arith.select %79, %23, %80 : vector<16x16xi1>, vector<16x16xi32>
    %cst_28 = arith.constant dense<2147483647> : vector<16xi32>
    %82 = vector.multi_reduction <minsi>, %81, %cst_28 [1] : vector<16x16xi32> to vector<16xi32>
    %83 = vector.shape_cast %82 : vector<16xi32> to vector<16x1xi32>
    %84 = vector.broadcast %83 : vector<16x1xi32> to vector<16x16xi32>
    %85 = arith.cmpi eq, %23, %84 : vector<16x16xi32>
    %cst_29 = arith.constant 1.000000e+00 : f32
    %86 = vector.broadcast %cst_29 : f32 to vector<16x16xf32>
    %87 = arith.select %85, %86, %73 : vector<16x16xi1>, vector<16x16xf32>
    %c0_30 = arith.constant 0 : index
    %c0_31 = arith.constant 0 : index
    %c0_32 = arith.constant 0 : index
    %88 = vector.load %arg9[%c0_30, %c0_31, %c0_32] : memref<1x16x16xf32, #tpu.memory_space<vmem>>, vector<1x16x16xf32>
    %89 = vector.shape_cast %88 : vector<1x16x16xf32> to vector<16x16xf32>
    %90 = vector.shape_cast %87 : vector<16x16xf32> to vector<1x16x16xf32>
    tpu.vector_store %arg9[%c0_30, %c0_31, %c0_32], %90 {strides = array<i32>} : memref<1x16x16xf32, #tpu.memory_space<vmem>>, vector<1x16x16xf32>,
    %c0_33 = arith.constant 0 : index
    %c0_34 = arith.constant 0 : index
    %c0_35 = arith.constant 0 : index
    %91 = vector.load %arg3[%c0_33, %c0_34, %c0_35] : memref<1x16x32xf32, #tpu.memory_space<vmem>>, vector<1x16x32xf32>
    %92 = vector.shape_cast %91 : vector<1x16x32xf32> to vector<16x32xf32>
    %93 = tpu.transpose %21, [1, 0] : vector<1x16xf32> -> vector<16x1xf32>
    %94 = vector.broadcast %93 : vector<16x1xf32> to vector<16x16xf32>
    %95 = arith.mulf %87, %94 : vector<16x16xf32>
    %96 = vector.broadcast %21 : vector<1x16xf32> to vector<16x16xf32>
    %97 = arith.mulf %95, %96 : vector<16x16xf32>
    %cst_36 = arith.constant dense<0.000000e+00> : vector<16xf32>
    %98 = vector.multi_reduction <add>, %97, %cst_36 [0] : vector<16x16xf32> to vector<16xf32>
    %99 = vector.shape_cast %98 : vector<16xf32> to vector<1x16xf32>
    %100 = tpu.transpose %99, [1, 0] : vector<1x16xf32> -> vector<16x1xf32>
    %c0_37 = arith.constant 0 : index
    %c0_38 = arith.constant 0 : index
    %c0_39 = arith.constant 0 : index
    %101 = vector.load %arg5[%c0_37, %c0_38, %c0_39] : memref<2x32x64xf32, #tpu.memory_space<vmem>>, vector<1x32x64xf32>
    %102 = vector.shape_cast %101 : vector<1x32x64xf32> to vector<32x64xf32>
    %cst_40 = arith.constant dense<0.000000e+00> : vector<16x64xf32>
    %103 = tpu.matmul %92, %102, %cst_40 {dimension_numbers = #tpu.dot_dimension_numbers<[1], [0], [0], [1], [0, 0, 1, 1], [], []>} : vector<16x32xf32>, vector<32x64xf32>, vector<16x64xf32> -> vector<16x64xf32>
    %104 = vector.extract_strided_slice %103 {offsets = [0, 0], sizes = [16, 32], strides = [1, 1]} : vector<16x64xf32> to vector<16x32xf32>
    %105 = vector.extract_strided_slice %103 {offsets = [0, 32], sizes = [16, 32], strides = [1, 1]} : vector<16x64xf32> to vector<16x32xf32>
    %106 = vector.shape_cast %104 : vector<16x32xf32> to vector<1x16x32xf32>
    %107 = vector.shape_cast %105 : vector<16x32xf32> to vector<16x1x32xf32>
    %108 = vector.broadcast %106 : vector<1x16x32xf32> to vector<16x16x32xf32>
    %109 = vector.broadcast %107 : vector<16x1x32xf32> to vector<16x16x32xf32>
    %110 = arith.addf %108, %109 : vector<16x16x32xf32>
    %111 = vector.shape_cast %105 : vector<16x32xf32> to vector<1x16x32xf32>
    %112 = vector.broadcast %111 : vector<1x16x32xf32> to vector<16x16x32xf32>
    %113 = arith.subf %110, %112 : vector<16x16x32xf32>
    %c0_41 = arith.constant 0 : index
    %c0_42 = arith.constant 0 : index
    %c0_43 = arith.constant 0 : index
    %114 = vector.load %arg6[%c0_41, %c0_42, %c0_43] : memref<2x1x32xf32, #tpu.memory_space<vmem>>, vector<1x1x32xf32>
    %115 = vector.shape_cast %114 : vector<1x1x32xf32> to vector<1x32xf32>
    %116 = vector.shape_cast %115 : vector<1x32xf32> to vector<1x1x32xf32>
    %117 = vector.broadcast %116 : vector<1x1x32xf32> to vector<16x16x32xf32>
    %118 = arith.addf %113, %117 : vector<16x16x32xf32>
    %cst_44 = arith.constant 0.000000e+00 : f32
    %119 = vector.broadcast %cst_44 : f32 to vector<16x16x32xf32>
    %120 = arith.maximumf %118, %119 : vector<16x16x32xf32>
    %121 = vector.shape_cast %97 : vector<16x16xf32> to vector<16x16x1xf32>
    %122 = vector.broadcast %121 : vector<16x16x1xf32> to vector<16x16x32xf32>
    %123 = arith.mulf %122, %120 : vector<16x16x32xf32>
    %cst_45 = arith.constant dense<0.000000e+00> : vector<16x32xf32>
    %124 = vector.multi_reduction <add>, %123, %cst_45 [0] : vector<16x16x32xf32> to vector<16x32xf32>
    %c0_46 = arith.constant 0 : index
    %c0_47 = arith.constant 0 : index
    %c0_48 = arith.constant 0 : index
    %125 = vector.load %arg7[%c0_46, %c0_47, %c0_48] : memref<2x32x32xf32, #tpu.memory_space<vmem>>, vector<1x32x32xf32>
    %126 = vector.shape_cast %125 : vector<1x32x32xf32> to vector<32x32xf32>
    %cst_49 = arith.constant dense<0.000000e+00> : vector<16x32xf32>
    %127 = tpu.matmul %124, %126, %cst_49 {dimension_numbers = #tpu.dot_dimension_numbers<[1], [0], [0], [1], [0, 0, 1, 1], [], []>} : vector<16x32xf32>, vector<32x32xf32>, vector<16x32xf32> -> vector<16x32xf32>
    %c0_50 = arith.constant 0 : index
    %c0_51 = arith.constant 0 : index
    %c0_52 = arith.constant 0 : index
    %128 = vector.load %arg8[%c0_50, %c0_51, %c0_52] : memref<2x1x32xf32, #tpu.memory_space<vmem>>, vector<1x1x32xf32>
    %129 = vector.shape_cast %128 : vector<1x1x32xf32> to vector<1x32xf32>
    %130 = vector.broadcast %100 : vector<16x1xf32> to vector<16x32xf32>
    %131 = vector.broadcast %129 : vector<1x32xf32> to vector<16x32xf32>
    %132 = arith.mulf %130, %131 : vector<16x32xf32>
    %133 = arith.addf %127, %132 : vector<16x32xf32>
    %c1 = arith.constant 1 : index
    %c0_53 = arith.constant 0 : index
    %c0_54 = arith.constant 0 : index
    %134 = vector.load %arg5[%c1, %c0_53, %c0_54] : memref<2x32x64xf32, #tpu.memory_space<vmem>>, vector<1x32x64xf32>
    %135 = vector.shape_cast %134 : vector<1x32x64xf32> to vector<32x64xf32>
    %cst_55 = arith.constant dense<0.000000e+00> : vector<16x64xf32>
    %136 = tpu.matmul %133, %135, %cst_55 {dimension_numbers = #tpu.dot_dimension_numbers<[1], [0], [0], [1], [0, 0, 1, 1], [], []>} : vector<16x32xf32>, vector<32x64xf32>, vector<16x64xf32> -> vector<16x64xf32>
    %137 = vector.extract_strided_slice %136 {offsets = [0, 0], sizes = [16, 32], strides = [1, 1]} : vector<16x64xf32> to vector<16x32xf32>
    %138 = vector.extract_strided_slice %136 {offsets = [0, 32], sizes = [16, 32], strides = [1, 1]} : vector<16x64xf32> to vector<16x32xf32>
    %139 = vector.shape_cast %137 : vector<16x32xf32> to vector<1x16x32xf32>
    %140 = vector.shape_cast %138 : vector<16x32xf32> to vector<16x1x32xf32>
    %141 = vector.broadcast %139 : vector<1x16x32xf32> to vector<16x16x32xf32>
    %142 = vector.broadcast %140 : vector<16x1x32xf32> to vector<16x16x32xf32>
    %143 = arith.addf %141, %142 : vector<16x16x32xf32>
    %144 = vector.shape_cast %138 : vector<16x32xf32> to vector<1x16x32xf32>
    %145 = vector.broadcast %144 : vector<1x16x32xf32> to vector<16x16x32xf32>
    %146 = arith.subf %143, %145 : vector<16x16x32xf32>
    %c1_56 = arith.constant 1 : index
    %c0_57 = arith.constant 0 : index
    %c0_58 = arith.constant 0 : index
    %147 = vector.load %arg6[%c1_56, %c0_57, %c0_58] : memref<2x1x32xf32, #tpu.memory_space<vmem>>, vector<1x1x32xf32>
    %148 = vector.shape_cast %147 : vector<1x1x32xf32> to vector<1x32xf32>
    %149 = vector.shape_cast %148 : vector<1x32xf32> to vector<1x1x32xf32>
    %150 = vector.broadcast %149 : vector<1x1x32xf32> to vector<16x16x32xf32>
    %151 = arith.addf %146, %150 : vector<16x16x32xf32>
    %cst_59 = arith.constant 0.000000e+00 : f32
    %152 = vector.broadcast %cst_59 : f32 to vector<16x16x32xf32>
    %153 = arith.maximumf %151, %152 : vector<16x16x32xf32>
    %154 = vector.shape_cast %97 : vector<16x16xf32> to vector<16x16x1xf32>
    %155 = vector.broadcast %154 : vector<16x16x1xf32> to vector<16x16x32xf32>
    %156 = arith.mulf %155, %153 : vector<16x16x32xf32>
    %cst_60 = arith.constant dense<0.000000e+00> : vector<16x32xf32>
    %157 = vector.multi_reduction <add>, %156, %cst_60 [0] : vector<16x16x32xf32> to vector<16x32xf32>
    %c1_61 = arith.constant 1 : index
    %c0_62 = arith.constant 0 : index
    %c0_63 = arith.constant 0 : index
    %158 = vector.load %arg7[%c1_61, %c0_62, %c0_63] : memref<2x32x32xf32, #tpu.memory_space<vmem>>, vector<1x32x32xf32>
    %159 = vector.shape_cast %158 : vector<1x32x32xf32> to vector<32x32xf32>
    %cst_64 = arith.constant dense<0.000000e+00> : vector<16x32xf32>
    %160 = tpu.matmul %157, %159, %cst_64 {dimension_numbers = #tpu.dot_dimension_numbers<[1], [0], [0], [1], [0, 0, 1, 1], [], []>} : vector<16x32xf32>, vector<32x32xf32>, vector<16x32xf32> -> vector<16x32xf32>
    %c1_65 = arith.constant 1 : index
    %c0_66 = arith.constant 0 : index
    %c0_67 = arith.constant 0 : index
    %161 = vector.load %arg8[%c1_65, %c0_66, %c0_67] : memref<2x1x32xf32, #tpu.memory_space<vmem>>, vector<1x1x32xf32>
    %162 = vector.shape_cast %161 : vector<1x1x32xf32> to vector<1x32xf32>
    %163 = vector.broadcast %100 : vector<16x1xf32> to vector<16x32xf32>
    %164 = vector.broadcast %162 : vector<1x32xf32> to vector<16x32xf32>
    %165 = arith.mulf %163, %164 : vector<16x32xf32>
    %166 = arith.addf %160, %165 : vector<16x32xf32>
    %167 = arith.addf %92, %166 : vector<16x32xf32>
    %168 = vector.broadcast %93 : vector<16x1xf32> to vector<16x32xf32>
    %169 = arith.mulf %168, %167 : vector<16x32xf32>
    %c0_68 = arith.constant 0 : index
    %c0_69 = arith.constant 0 : index
    %c0_70 = arith.constant 0 : index
    %170 = vector.load %arg10[%c0_68, %c0_69, %c0_70] : memref<1x16x32xf32, #tpu.memory_space<vmem>>, vector<1x16x32xf32>
    %171 = vector.shape_cast %170 : vector<1x16x32xf32> to vector<16x32xf32>
    %172 = vector.shape_cast %169 : vector<16x32xf32> to vector<1x16x32xf32>
    tpu.vector_store %arg10[%c0_68, %c0_69, %c0_70], %172 {strides = array<i32>} : memref<1x16x32xf32, #tpu.memory_space<vmem>>, vector<1x16x32xf32>,
    return
  }
  func.func @transform_0(%arg0: i32) -> (i32, i32, i32) {
    %c0_i32 = arith.constant 0 : i32
    %c0_i32_0 = arith.constant 0 : i32
    %c0_i32_1 = arith.constant 0 : i32
    return %arg0, %c0_i32, %c0_i32_0 : i32, i32, i32
  }
  func.func @transform_1(%arg0: i32) -> (i32, i32, i32) {
    %c0_i32 = arith.constant 0 : i32
    %c0_i32_0 = arith.constant 0 : i32
    %c0_i32_1 = arith.constant 0 : i32
    return %arg0, %c0_i32, %c0_i32_0 : i32, i32, i32
  }
  func.func @transform_2(%arg0: i32) -> (i32, i32, i32) {
    %c0_i32 = arith.constant 0 : i32
    %c0_i32_0 = arith.constant 0 : i32
    %c0_i32_1 = arith.constant 0 : i32
    return %arg0, %c0_i32, %c0_i32_0 : i32, i32, i32
  }
  func.func @transform_3(%arg0: i32) -> (i32, i32, i32) {
    %c0_i32 = arith.constant 0 : i32
    %c0_i32_0 = arith.constant 0 : i32
    %c0_i32_1 = arith.constant 0 : i32
    return %arg0, %c0_i32, %c0_i32_0 : i32, i32, i32
  }
  func.func @transform_4(%arg0: i32) -> (i32, i32, i32) {
    %c0_i32 = arith.constant 0 : i32
    %c0_i32_0 = arith.constant 0 : i32
    %c0_i32_1 = arith.constant 0 : i32
    %c0_i32_2 = arith.constant 0 : i32
    return %c0_i32, %c0_i32_0, %c0_i32_1 : i32, i32, i32
  }
  func.func @transform_5(%arg0: i32) -> (i32, i32, i32) {
    %c0_i32 = arith.constant 0 : i32
    %c0_i32_0 = arith.constant 0 : i32
    %c0_i32_1 = arith.constant 0 : i32
    %c0_i32_2 = arith.constant 0 : i32
    return %c0_i32, %c0_i32_0, %c0_i32_1 : i32, i32, i32
  }
  func.func @transform_6(%arg0: i32) -> (i32, i32, i32) {
    %c0_i32 = arith.constant 0 : i32
    %c0_i32_0 = arith.constant 0 : i32
    %c0_i32_1 = arith.constant 0 : i32
    %c0_i32_2 = arith.constant 0 : i32
    return %c0_i32, %c0_i32_0, %c0_i32_1 : i32, i32, i32
  }
  func.func @transform_7(%arg0: i32) -> (i32, i32, i32) {
    %c0_i32 = arith.constant 0 : i32
    %c0_i32_0 = arith.constant 0 : i32
    %c0_i32_1 = arith.constant 0 : i32
    %c0_i32_2 = arith.constant 0 : i32
    return %c0_i32, %c0_i32_0, %c0_i32_1 : i32, i32, i32
  }
  func.func @transform_8(%arg0: i32) -> (i32, i32, i32) {
    %c0_i32 = arith.constant 0 : i32
    %c0_i32_0 = arith.constant 0 : i32
    %c0_i32_1 = arith.constant 0 : i32
    return %arg0, %c0_i32, %c0_i32_0 : i32, i32, i32
  }
  func.func @transform_9(%arg0: i32) -> (i32, i32, i32) {
    %c0_i32 = arith.constant 0 : i32
    %c0_i32_0 = arith.constant 0 : i32
    %c0_i32_1 = arith.constant 0 : i32
    return %arg0, %c0_i32, %c0_i32_0 : i32, i32, i32
  }
}

</mosaic_0001>

<llo_original>
// kernel: tpu_custom_call.1
$region0: #{tpu_custom_call.1}
  #allocation0 [shape = 'u32[]', space=smem, size = 0x4, offset = 0x4, fixed_abs, tag = 'smem constant byte address 0x4 - core index']
  #allocation1 [shape = 'u32[144,128]{1,0:T(1,128)}', space=vmem, size = 0x12000, scoped, tag = 'internal scratch']
  %s0 = inlined_call_operand.vmem [shape: f32[2,128,8], index: 0, kind: input, shape index: {}]
  %s1 = inlined_call_operand.vmem [shape: f32[2,8,16], index: 1, kind: input, shape index: {}]
  %s2 = inlined_call_operand.vmem [shape: f32[2,16,32], index: 2, kind: input, shape index: {}]
  %s3 = inlined_call_operand.vmem [shape: f32[2,1,16], index: 3, kind: input, shape index: {}]
  %s4 = inlined_call_operand.vmem [shape: f32[2,32,64], index: 4, kind: input, shape index: {}]
  %s5 = inlined_call_operand.vmem [shape: f32[2,1,32], index: 5, kind: input, shape index: {}]
  %s6 = inlined_call_operand.vmem [shape: f32[2,32,32], index: 6, kind: input, shape index: {}]
  %s7 = inlined_call_operand.vmem [shape: f32[2,1,32], index: 7, kind: input, shape index: {}]
  %s8 = inlined_call_operand.hbm [shape: f32[2,16,16], index: 8, kind: output, shape index: {0}]
  %s9 = inlined_call_operand.hbm [shape: f32[2,16,32], index: 9, kind: output, shape index: {1}]
  %10 = xla_tuple %s8, %s9
  %s11 = sld [smem:[#allocation0]]
  $region73: #{tpu_custom_call.1} parent=0
    _
  %s13 = ssub.s32 1, %s11
  %s14 = scalar_select 0, %s13, %s11
  $region1: #{tpu_custom_call.1} parent=0
    #allocation2 [shape = 'u8[16384]{0}', space=vmem, size = 0x4000, scoped, tag = 'output window, operand 0']
    #allocation3 [shape = 's32[2]{0}', space=sflag, size = 0x8, scoped, tag = 'scoped memory for tpu_custom_call.1']
    #allocation4 [shape = 'u8[16384]{0}', space=vmem, size = 0x4000, scoped, tag = 'output window, operand 1']
    #allocation5 [shape = 's32[2]{0}', space=sflag, size = 0x8, scoped, tag = 'scoped memory for tpu_custom_call.1']
    %15 = vsyncpa [#allocation3], 0
    %s16 = scalar_lea.sflag [#allocation3], 1
    %17 = vsyncpa %s16, 0
    %18 = vsyncpa [#allocation5], 0
    %s19 = scalar_lea.sflag [#allocation5], 1
    %20 = vsyncpa %s19, 0
    loop: start=0, step=1, limit=4
    $region2: #{tpu_custom_call.1} parent=1 // loop_pre_header
      _
    $region3: #{tpu_custom_call.1} parent=1 // loop_header
      %s22 = sphi 0, %s26
      %p23 = scmp.ge.s32.totalorder %s22, 4
      %s32 = sphi 0, %s34
      %s35 = sphi 0, %s32
      %s36 = sphi 0, %s35
      %s52 = sphi 0, %s36
      %s58 = sphi 0, %s60
      %s61 = sphi 0, %s58
      %s62 = sphi 0, %s61
      %s78 = sphi 0, %s62
      %s84 = sphi 0, %s86
      %s87 = sphi 0, %s84
      %s88 = sphi 0, %s87
      %s104 = sphi 0, %s88
      %s110 = sphi 0, %s112
      %s113 = sphi 0, %s110
      %s114 = sphi 0, %s113
      %s130 = sphi 0, %s114
      %s134 = sphi 0, %s134
      %s136 = sphi 0, %s134
      %s137 = sphi 0, %s136
      %s151 = sphi 0, %s137
      %s155 = sphi 0, %s155
      %s157 = sphi 0, %s155
      %s158 = sphi 0, %s157
      %s172 = sphi 0, %s158
      %s176 = sphi 0, %s176
      %s178 = sphi 0, %s176
      %s179 = sphi 0, %s178
      %s193 = sphi 0, %s179
      %s197 = sphi 0, %s197
      %s199 = sphi 0, %s197
      %s200 = sphi 0, %s199
      %s214 = sphi 0, %s200
      %s220 = sphi 0, %s222
      %s223 = sphi 0, %s220
      %s224 = sphi 0, %s223
      %s240 = sphi 0, %s224
      %s246 = sphi 0, %s248
      %s249 = sphi 0, %s246
      %s250 = sphi 0, %s249
      %s266 = sphi 0, %s250
    $region4: #{tpu_custom_call.1} parent=1 // loop_header_branch
      %25 = sbr.rel (%p23) target = $region8
    $region5: #{tpu_custom_call.1} parent=1 // loop_body
      %s27 = ssub.s32 %s22, 1
      %s28 = ssub.s32 %s22, 2
      %s29 = sadd.s32 %s22, 1
      %s30 = ssub.s32 %s22, %s29
      %p31 = scmp.eq.s32.totalorder %s30, 0
      %s33 = sadd.s32 %s32, 1
      %s34 = scalar_select %p31, %s32, %s33
      %p37 = pneg %p31
      %p38 = scmp.eq.s32.totalorder %s22, 1
      %p39 = por %p37, %p38
      %p40 = scmp.ne.s32.totalorder %s32, %s35
      %p41 = scmp.eq.s32.totalorder %s22, 0
      %p42 = por %p40, %p41
      %p43 = scmp.ne.s32.totalorder %s32, %s35
      %p44 = scmp.eq.s32.totalorder %s27, 1
      %p45 = por %p43, %p44
      %p46 = scmp.ne.s32.totalorder %s35, %s36
      %p47 = scmp.eq.s32.totalorder %s27, 0
      %p48 = por %p46, %p47
      %p49 = scmp.ne.s32.totalorder %s35, %s36
      %p50 = scmp.eq.s32.totalorder %s28, 1
      %p51 = por %p49, %p50
      %p53 = scmp.ne.s32.totalorder %s36, %s52
      %p54 = scmp.eq.s32.totalorder %s28, 0
      %p55 = por %p53, %p54
      %s56 = ssub.s32 %s22, %s29
      %p57 = scmp.eq.s32.totalorder %s56, 0
      %s59 = sadd.s32 %s58, 1
      %s60 = scalar_select %p57, %s58, %s59
      %p63 = pneg %p57
      %p64 = scmp.eq.s32.totalorder %s22, 1
      %p65 = por %p63, %p64
      %p66 = scmp.ne.s32.totalorder %s58, %s61
      %p67 = scmp.eq.s32.totalorder %s22, 0
      %p68 = por %p66, %p67
      %p69 = scmp.ne.s32.totalorder %s58, %s61
      %p70 = scmp.eq.s32.totalorder %s27, 1
      %p71 = por %p69, %p70
      %p72 = scmp.ne.s32.totalorder %s61, %s62
      %p73 = scmp.eq.s32.totalorder %s27, 0
      %p74 = por %p72, %p73
      %p75 = scmp.ne.s32.totalorder %s61, %s62
      %p76 = scmp.eq.s32.totalorder %s28, 1
      %p77 = por %p75, %p76
      %p79 = scmp.ne.s32.totalorder %s62, %s78
      %p80 = scmp.eq.s32.totalorder %s28, 0
      %p81 = por %p79, %p80
      %s82 = ssub.s32 %s22, %s29
      %p83 = scmp.eq.s32.totalorder %s82, 0
      %s85 = sadd.s32 %s84, 1
      %s86 = scalar_select %p83, %s84, %s85
      %p89 = pneg %p83
      %p90 = scmp.eq.s32.totalorder %s22, 1
      %p91 = por %p89, %p90
      %p92 = scmp.ne.s32.totalorder %s84, %s87
      %p93 = scmp.eq.s32.totalorder %s22, 0
      %p94 = por %p92, %p93
      %p95 = scmp.ne.s32.totalorder %s84, %s87
      %p96 = scmp.eq.s32.totalorder %s27, 1
      %p97 = por %p95, %p96
      %p98 = scmp.ne.s32.totalorder %s87, %s88
      %p99 = scmp.eq.s32.totalorder %s27, 0
      %p100 = por %p98, %p99
      %p101 = scmp.ne.s32.totalorder %s87, %s88
      %p102 = scmp.eq.s32.totalorder %s28, 1
      %p103 = por %p101, %p102
      %p105 = scmp.ne.s32.totalorder %s88, %s104
      %p106 = scmp.eq.s32.totalorder %s28, 0
      %p107 = por %p105, %p106
      %s108 = ssub.s32 %s22, %s29
      %p109 = scmp.eq.s32.totalorder %s108, 0
      %s111 = sadd.s32 %s110, 1
      %s112 = scalar_select %p109, %s110, %s111
      %p115 = pneg %p109
      %p116 = scmp.eq.s32.totalorder %s22, 1
      %p117 = por %p115, %p116
      %p118 = scmp.ne.s32.totalorder %s110, %s113
      %p119 = scmp.eq.s32.totalorder %s22, 0
      %p120 = por %p118, %p119
      %p121 = scmp.ne.s32.totalorder %s110, %s113
      %p122 = scmp.eq.s32.totalorder %s27, 1
      %p123 = por %p121, %p122
      %p124 = scmp.ne.s32.totalorder %s113, %s114
      %p125 = scmp.eq.s32.totalorder %s27, 0
      %p126 = por %p124, %p125
      %p127 = scmp.ne.s32.totalorder %s113, %s114
      %p128 = scmp.eq.s32.totalorder %s28, 1
      %p129 = por %p127, %p128
      %p131 = scmp.ne.s32.totalorder %s114, %s130
      %p132 = scmp.eq.s32.totalorder %s28, 0
      %p133 = por %p131, %p132
      %s135 = sadd.s32 %s134, 1
      %p138 = scmp.eq.s32.totalorder %s22, 1
      %p139 = scmp.ne.s32.totalorder %s134, %s136
      %p140 = scmp.eq.s32.totalorder %s22, 0
      %p141 = por %p139, %p140
      %p142 = scmp.ne.s32.totalorder %s134, %s136
      %p143 = scmp.eq.s32.totalorder %s27, 1
      %p144 = por %p142, %p143
      %p145 = scmp.ne.s32.totalorder %s136, %s137
      %p146 = scmp.eq.s32.totalorder %s27, 0
      %p147 = por %p145, %p146
      %p148 = scmp.ne.s32.totalorder %s136, %s137
      %p149 = scmp.eq.s32.totalorder %s28, 1
      %p150 = por %p148, %p149
      %p152 = scmp.ne.s32.totalorder %s137, %s151
      %p153 = scmp.eq.s32.totalorder %s28, 0
      %p154 = por %p152, %p153
      %s156 = sadd.s32 %s155, 1
      %p159 = scmp.eq.s32.totalorder %s22, 1
      %p160 = scmp.ne.s32.totalorder %s155, %s157
      %p161 = scmp.eq.s32.totalorder %s22, 0
      %p162 = por %p160, %p161
      %p163 = scmp.ne.s32.totalorder %s155, %s157
      %p164 = scmp.eq.s32.totalorder %s27, 1
      %p165 = por %p163, %p164
      %p166 = scmp.ne.s32.totalorder %s157, %s158
      %p167 = scmp.eq.s32.totalorder %s27, 0
      %p168 = por %p166, %p167
      %p169 = scmp.ne.s32.totalorder %s157, %s158
      %p170 = scmp.eq.s32.totalorder %s28, 1
      %p171 = por %p169, %p170
      %p173 = scmp.ne.s32.totalorder %s158, %s172
      %p174 = scmp.eq.s32.totalorder %s28, 0
      %p175 = por %p173, %p174
      %s177 = sadd.s32 %s176, 1
      %p180 = scmp.eq.s32.totalorder %s22, 1
      %p181 = scmp.ne.s32.totalorder %s176, %s178
      %p182 = scmp.eq.s32.totalorder %s22, 0
      %p183 = por %p181, %p182
      %p184 = scmp.ne.s32.totalorder %s176, %s178
      %p185 = scmp.eq.s32.totalorder %s27, 1
      %p186 = por %p184, %p185
      %p187 = scmp.ne.s32.totalorder %s178, %s179
      %p188 = scmp.eq.s32.totalorder %s27, 0
      %p189 = por %p187, %p188
      %p190 = scmp.ne.s32.totalorder %s178, %s179
      %p191 = scmp.eq.s32.totalorder %s28, 1
      %p192 = por %p190, %p191
      %p194 = scmp.ne.s32.totalorder %s179, %s193
      %p195 = scmp.eq.s32.totalorder %s28, 0
      %p196 = por %p194, %p195
      %s198 = sadd.s32 %s197, 1
      %p201 = scmp.eq.s32.totalorder %s22, 1
      %p202 = scmp.ne.s32.totalorder %s197, %s199
      %p203 = scmp.eq.s32.totalorder %s22, 0
      %p204 = por %p202, %p203
      %p205 = scmp.ne.s32.totalorder %s197, %s199
      %p206 = scmp.eq.s32.totalorder %s27, 1
      %p207 = por %p205, %p206
      %p208 = scmp.ne.s32.totalorder %s199, %s200
      %p209 = scmp.eq.s32.totalorder %s27, 0
      %p210 = por %p208, %p209
      %p211 = scmp.ne.s32.totalorder %s199, %s200
      %p212 = scmp.eq.s32.totalorder %s28, 1
      %p213 = por %p211, %p212
      %p215 = scmp.ne.s32.totalorder %s200, %s214
      %p216 = scmp.eq.s32.totalorder %s28, 0
      %p217 = por %p215, %p216
      %s218 = ssub.s32 %s22, %s29
      %p219 = scmp.eq.s32.totalorder %s218, 0
      %s221 = sadd.s32 %s220, 1
      %s222 = scalar_select %p219, %s220, %s221
      %p225 = pneg %p219
      %p226 = scmp.eq.s32.totalorder %s22, 1
      %p227 = por %p225, %p226
      %p228 = scmp.ne.s32.totalorder %s220, %s223
      %p229 = scmp.eq.s32.totalorder %s22, 0
      %p230 = por %p228, %p229
      %p231 = scmp.ne.s32.totalorder %s220, %s223
      %p232 = scmp.eq.s32.totalorder %s27, 1
      %p233 = por %p231, %p232
      %p234 = scmp.ne.s32.totalorder %s223, %s224
      %p235 = scmp.eq.s32.totalorder %s27, 0
      %p236 = por %p234, %p235
      %p237 = scmp.ne.s32.totalorder %s223, %s224
      %p238 = scmp.eq.s32.totalorder %s28, 1
      %p239 = por %p237, %p238
      %p241 = scmp.ne.s32.totalorder %s224, %s240
      %p242 = scmp.eq.s32.totalorder %s28, 0
      %p243 = por %p241, %p242
      %s244 = ssub.s32 %s22, %s29
      %p245 = scmp.eq.s32.totalorder %s244, 0
      %s247 = sadd.s32 %s246, 1
      %s248 = scalar_select %p245, %s246, %s247
      %p251 = pneg %p245
      %p252 = scmp.eq.s32.totalorder %s22, 1
      %p253 = por %p251, %p252
      %p254 = scmp.ne.s32.totalorder %s246, %s249
      %p255 = scmp.eq.s32.totalorder %s22, 0
      %p256 = por %p254, %p255
      %p257 = scmp.ne.s32.totalorder %s246, %s249
      %p258 = scmp.eq.s32.totalorder %s27, 1
      %p259 = por %p257, %p258
      %p260 = scmp.ne.s32.totalorder %s249, %s250
      %p261 = scmp.eq.s32.totalorder %s27, 0
      %p262 = por %p260, %p261
      %p263 = scmp.ne.s32.totalorder %s249, %s250
      %p264 = scmp.eq.s32.totalorder %s28, 1
      %p265 = por %p263, %p264
      %p267 = scmp.ne.s32.totalorder %s250, %s266
      %p268 = scmp.eq.s32.totalorder %s28, 0
      %p269 = por %p267, %p268
      %p270 = scmp.le.s32.totalorder 1, %s22
      %p271 = scmp.lt.s32.totalorder %s22, 3
      %p272 = pnand %p270, %p271
      %p273 = pneg %p272
      // Predicated region
      $region9: #{tpu_custom_call.1} parent=5 // pred_check
        _
      $region10: #{tpu_custom_call.1} parent=5 // pred_check_branch
        %275 = sbr.rel (%p272) target = $region12
      $region11: #{tpu_custom_call.1} parent=5 // pred_region
        %s276 = ssub.s32 %s22, 1
        // Predicated region
        $region13: #{tpu_custom_call.1} parent=11 // pred_check
          %p277 = pneg %p147
        $region14: #{tpu_custom_call.1} parent=11 // pred_check_branch
          %279 = sbr.rel (%p277) target = $region16
        $region15: #{tpu_custom_call.1} parent=11 // pred_region
          _
        $region16: #{tpu_custom_call.1} parent=11 // pred_fallthru
          _
        // Predicated region
        $region17: #{tpu_custom_call.1} parent=11 // pred_check
          %p280 = pneg %p168
        $region18: #{tpu_custom_call.1} parent=11 // pred_check_branch
          %282 = sbr.rel (%p280) target = $region20
        $region19: #{tpu_custom_call.1} parent=11 // pred_region
          _
        $region20: #{tpu_custom_call.1} parent=11 // pred_fallthru
          _
        // Predicated region
        $region21: #{tpu_custom_call.1} parent=11 // pred_check
          %p283 = pneg %p189
        $region22: #{tpu_custom_call.1} parent=11 // pred_check_branch
          %285 = sbr.rel (%p283) target = $region24
        $region23: #{tpu_custom_call.1} parent=11 // pred_region
          _
        $region24: #{tpu_custom_call.1} parent=11 // pred_fallthru
          _
        // Predicated region
        $region25: #{tpu_custom_call.1} parent=11 // pred_check
          %p286 = pneg %p210
        $region26: #{tpu_custom_call.1} parent=11 // pred_check_branch
          %288 = sbr.rel (%p286) target = $region28
        $region27: #{tpu_custom_call.1} parent=11 // pred_region
          _
        $region28: #{tpu_custom_call.1} parent=11 // pred_fallthru
          _
      $region12: #{tpu_custom_call.1} parent=5 // pred_fallthru
        _
      %p289 = scmp.lt.s32.totalorder %s22, 2
      // Predicated region
      $region29: #{tpu_custom_call.1} parent=5 // pred_check
        %p290 = pneg %p289
      $region30: #{tpu_custom_call.1} parent=5 // pred_check_branch
        %292 = sbr.rel (%p290) target = $region32
      $region31: #{tpu_custom_call.1} parent=5 // pred_region
        // Predicated region
        $region33: #{tpu_custom_call.1} parent=31 // pred_check
          %p293 = pneg %p42
        $region34: #{tpu_custom_call.1} parent=31 // pred_check_branch
          %295 = sbr.rel (%p293) target = $region36
        $region35: #{tpu_custom_call.1} parent=31 // pred_region
          %p296 = scmp.lt.s32.totalorder %s22, 1
          %s297 = scalar_select %p296, %s22, 1
          %s298 = smul.addr %s297, 16
          %s299 = smul.addr %s298, 8
          %s300 = scalar_lea.vmem %s0, %s299
        $region36: #{tpu_custom_call.1} parent=31 // pred_fallthru
          _
        // Predicated region
        $region37: #{tpu_custom_call.1} parent=31 // pred_check
          %p301 = pneg %p68
        $region38: #{tpu_custom_call.1} parent=31 // pred_check_branch
          %303 = sbr.rel (%p301) target = $region40
        $region39: #{tpu_custom_call.1} parent=31 // pred_region
          %p304 = scmp.lt.s32.totalorder %s22, 1
          %s305 = scalar_select %p304, %s22, 1
          %s306 = smul.addr %s305, 8
          %s307 = scalar_lea.vmem %s1, %s306
        $region40: #{tpu_custom_call.1} parent=31 // pred_fallthru
          _
        // Predicated region
        $region41: #{tpu_custom_call.1} parent=31 // pred_check
          %p308 = pneg %p94
        $region42: #{tpu_custom_call.1} parent=31 // pred_check_branch
          %310 = sbr.rel (%p308) target = $region44
        $region43: #{tpu_custom_call.1} parent=31 // pred_region
          %p311 = scmp.lt.s32.totalorder %s22, 1
          %s312 = scalar_select %p311, %s22, 1
          %s313 = smul.addr %s312, 2
          %s314 = smul.addr %s313, 8
          %s315 = scalar_lea.vmem %s2, %s314
        $region44: #{tpu_custom_call.1} parent=31 // pred_fallthru
          _
        // Predicated region
        $region45: #{tpu_custom_call.1} parent=31 // pred_check
          %p316 = pneg %p120
        $region46: #{tpu_custom_call.1} parent=31 // pred_check_branch
          %318 = sbr.rel (%p316) target = $region48
        $region47: #{tpu_custom_call.1} parent=31 // pred_region
          %p319 = scmp.lt.s32.totalorder %s22, 1
          %s320 = scalar_select %p319, %s22, 1
          %s321 = scalar_lea.vmem %s3, %s320
        $region48: #{tpu_custom_call.1} parent=31 // pred_fallthru
          _
      $region32: #{tpu_custom_call.1} parent=5 // pred_fallthru
        _
      %p322 = scmp.le.s32.totalorder 1, %s22
      %p323 = scmp.lt.s32.totalorder %s22, 3
      %p324 = pnand %p322, %p323
      %p325 = pneg %p324
      // Predicated region
      $region49: #{tpu_custom_call.1} parent=5 // pred_check
        _
      $region50: #{tpu_custom_call.1} parent=5 // pred_check_branch
        %327 = sbr.rel (%p324) target = $region52
      $region51: #{tpu_custom_call.1} parent=5 // pred_region
        %s328 = ssub.s32 %s22, 1
        %p329 = scmp.lt.s32.totalorder %s27, 1
        %s330 = scalar_select %p329, %s27, 1
        %s331 = smul.addr %s330, 16
        %s332 = smul.addr %s331, 8
        %s333 = scalar_lea.vmem %s0, %s332
        %p334 = pneg %p48
        %p335 = pneg %p45
        %p336 = scmp.lt.s32.totalorder %s27, 1
        %s337 = scalar_select %p336, %s27, 1
        %s338 = smul.addr %s337, 8
        %s339 = scalar_lea.vmem %s1, %s338
        %p340 = pneg %p74
        %p341 = pneg %p71
        %p342 = scmp.lt.s32.totalorder %s27, 1
        %s343 = scalar_select %p342, %s27, 1
        %s344 = smul.addr %s343, 2
        %s345 = smul.addr %s344, 8
        %s346 = scalar_lea.vmem %s2, %s345
        %p347 = pneg %p100
        %p348 = pneg %p97
        %p349 = scmp.lt.s32.totalorder %s27, 1
        %s350 = scalar_select %p349, %s27, 1
        %s351 = scalar_lea.vmem %s3, %s350
        %p352 = pneg %p126
        %p353 = pneg %p123
        %p354 = pneg %p147
        %p355 = pneg %p144
        %p356 = pneg %p168
        %p357 = pneg %p165
        %p358 = pneg %p189
        %p359 = pneg %p186
        %p360 = pneg %p210
        %p361 = pneg %p207
        %p362 = pneg %p236
        %p363 = pneg %p233
        %s364 = sand.u32 %s223, 1
        %s365 = scalar_lea.sflag [#allocation3], %s364
        %s366 = sand.u32 %s223, 1
        %s367 = smul.addr %s366, 16
        %s368 = scalar_lea.vmem [#allocation2], %s367
        %p369 = pneg %p262
        %p370 = pneg %p259
        %s371 = sand.u32 %s249, 1
        %s372 = scalar_lea.sflag [#allocation5], %s371
        %s373 = sand.u32 %s249, 1
        %s374 = smul.addr %s373, 16
        %s375 = scalar_lea.vmem [#allocation4], %s374
        %p376 = scmp.lt.s32.totalorder %s27, 1
        %s377 = scalar_select %p376, %s27, 1
        %s378 = smul.addr %s377, 16
        %s379 = smul.addr %s378, 8
        %s380 = scalar_lea.vmem %s0, %s379
        %p381 = scmp.lt.s32.totalorder %s27, 1
        %s382 = scalar_select %p381, %s27, 1
        %s383 = smul.addr %s382, 8
        %s384 = scalar_lea.vmem %s1, %s383
        %p385 = scmp.lt.s32.totalorder %s27, 1
        %s386 = scalar_select %p385, %s27, 1
        %s387 = smul.addr %s386, 2
        %s388 = smul.addr %s387, 8
        %s389 = scalar_lea.vmem %s2, %s388
        %p390 = scmp.lt.s32.totalorder %s27, 1
        %s391 = scalar_select %p390, %s27, 1
        %s392 = scalar_lea.vmem %s3, %s391
        %v393 = vld [vmem:[%s380] sm:$0xff]
        %v394 = vld [vmem:[%s380 + $0x8] sm:$0xff]
        %v395 = vld [vmem:[%s380 + $0x10] sm:$0xff]
        %v396 = vld [vmem:[%s380 + $0x18] sm:$0xff]
        %v397 = vld [vmem:[%s380 + $0x20] sm:$0xff]
        %v398 = vld [vmem:[%s380 + $0x28] sm:$0xff]
        %v399 = vld [vmem:[%s380 + $0x30] sm:$0xff]
        %v400 = vld [vmem:[%s380 + $0x38] sm:$0xff]
        %v401 = vld [vmem:[%s380 + $0x40] sm:$0xff]
        %v402 = vld [vmem:[%s380 + $0x48] sm:$0xff]
        %v403 = vld [vmem:[%s380 + $0x50] sm:$0xff]
        %v404 = vld [vmem:[%s380 + $0x58] sm:$0xff]
        %v405 = vld [vmem:[%s380 + $0x60] sm:$0xff]
        %v406 = vld [vmem:[%s380 + $0x68] sm:$0xff]
        %v407 = vld [vmem:[%s380 + $0x70] sm:$0xff]
        %v408 = vld [vmem:[%s380 + $0x78] sm:$0xff]
        %v409 = vld [vmem:[%s384] sm:$0xff]
        %vm410 = vcmask 64512
        %v412 = vsel %vm410, %v393, 0
        %v415 = vsel %vm410, %v394, 0
        %v418 = vsel %vm410, %v395, 0
        %v421 = vsel %vm410, %v396, 0
        %v424 = vsel %vm410, %v397, 0
        %v427 = vsel %vm410, %v398, 0
        %v430 = vsel %vm410, %v399, 0
        %v433 = vsel %vm410, %v400, 0
        %v436 = vsel %vm410, %v401, 0
        %v439 = vsel %vm410, %v402, 0
        %v442 = vsel %vm410, %v403, 0
        %v445 = vsel %vm410, %v404, 0
        %v448 = vsel %vm410, %v405, 0
        %v451 = vsel %vm410, %v406, 0
        %v454 = vsel %vm410, %v407, 0
        %v457 = vsel %vm410, %v408, 0
        %459 = vmatprep.subr.mxu0 0.0
        %460 = vmatpush1.msra.mxu0 %v409
        %461 = vmatprep.subr.mxu0 0.0
        %462 = vmatpush1.msra.mxu0 0.0
        %463 = vmatprep.subr.mxu0 0.0
        %464 = vmatpush1.msra.mxu0 0.0
        %465 = vmatprep.subr.mxu0 0.0
        %466 = vmatpush1.msra.mxu0 0.0
        %467 = vmatprep.subr.mxu0 0.0
        %468 = vmatpush1.msra.mxu0 0.0
        %469 = vmatprep.subr.mxu0 0.0
        %470 = vmatpush1.msra.mxu0 0.0
        %471 = vmatprep.subr.mxu0 0.0
        %472 = vmatpush1.msra.mxu0 0.0
        %473 = vmatprep.subr.mxu0 0.0
        %474 = vmatpush1.msra.mxu0 0.0
        %475 = vmatprep.subr.mxu0 0.0
        %476 = vmatpush1.msra.mxu0 0.0
        %477 = vmatprep.subr.mxu0 0.0
        %478 = vmatpush1.msra.mxu0 0.0
        %479 = vmatprep.subr.mxu0 0.0
        %480 = vmatpush1.msra.mxu0 0.0
        %481 = vmatprep.subr.mxu0 0.0
        %482 = vmatpush1.msra.mxu0 0.0
        %483 = vmatprep.subr.mxu0 0.0
        %484 = vmatpush1.msra.mxu0 0.0
        %485 = vmatprep.subr.mxu0 0.0
        %486 = vmatpush1.msra.mxu0 0.0
        %487 = vmatprep.subr.mxu0 0.0
        %488 = vmatpush1.msra.mxu0 0.0
        %489 = vmatprep.subr.mxu0 0.0
        %490 = vmatpush1.msra.mxu0 0.0
        %491 = vmatprep.subr.mxu0 0.0
        %492 = vmatpush1.msra.mxu0 0.0
        %493 = vmatprep.subr.mxu0 0.0
        %494 = vmatpush1.msra.mxu0 0.0
        %495 = vmatprep.subr.mxu0 0.0
        %496 = vmatpush1.msra.mxu0 0.0
        %497 = vmatprep.subr.mxu0 0.0
        %498 = vmatpush1.msra.mxu0 0.0
        %499 = vmatprep.subr.mxu0 0.0
        %500 = vmatpush1.msra.mxu0 0.0
        %501 = vmatprep.subr.mxu0 0.0
        %502 = vmatpush1.msra.mxu0 0.0
        %503 = vmatprep.subr.mxu0 0.0
        %504 = vmatpush1.msra.mxu0 0.0
        %505 = vmatprep.subr.mxu0 0.0
        %506 = vmatpush1.msra.mxu0 0.0
        %507 = vmatprep.subr.mxu0 0.0
        %508 = vmatpush1.msra.mxu0 0.0
        %509 = vmatprep.subr.mxu0 0.0
        %510 = vmatpush1.msra.mxu0 0.0
        %511 = vmatprep.subr.mxu0 0.0
        %512 = vmatpush1.msra.mxu0 0.0
        %513 = vmatprep.subr.mxu0 0.0
        %514 = vmatpush1.msra.mxu0 0.0
        %515 = vmatprep.subr.mxu0 0.0
        %516 = vmatpush1.msra.mxu0 0.0
        %517 = vmatprep.subr.mxu0 0.0
        %518 = vmatpush1.msra.mxu0 0.0
        %519 = vmatprep.subr.mxu0 0.0
        %520 = vmatpush1.msra.mxu0 0.0
        %521 = vmatprep.subr.mxu0 0.0
        %522 = vmatpush1.msra.mxu0 0.0
        %523 = vmatprep.mubr.f32.mxu0 0.0
        %524 = vmatmul.mubr.f32.gmra.mrb[0].mxu0 %v412
        %v525 = vpop.f32.mrb[0].mxu0
        %v526 = vadd.f32 0.0, %v525
        %v527 = vpop.f32.mrb[0].mxu0
        %528 = vmatprep.mubr.f32.mxu0 0.0
        %529 = vmatmul.mubr.f32.gmra.mrb[0].mxu0 %v415
        %v530 = vpop.f32.mrb[0].mxu0
        %v531 = vadd.f32 0.0, %v530
        %v532 = vpop.f32.mrb[0].mxu0
        %533 = vmatprep.mubr.f32.mxu0 0.0
        %534 = vmatmul.mubr.f32.gmra.mrb[0].mxu0 %v418
        %v535 = vpop.f32.mrb[0].mxu0
        %v536 = vadd.f32 0.0, %v535
        %v537 = vpop.f32.mrb[0].mxu0
        %538 = vmatprep.mubr.f32.mxu0 0.0
        %539 = vmatmul.mubr.f32.gmra.mrb[0].mxu0 %v421
        %v540 = vpop.f32.mrb[0].mxu0
        %v541 = vadd.f32 0.0, %v540
        %v542 = vpop.f32.mrb[0].mxu0
        %543 = vmatprep.mubr.f32.mxu0 0.0
        %544 = vmatmul.mubr.f32.gmra.mrb[0].mxu0 %v424
        %v545 = vpop.f32.mrb[0].mxu0
        %v546 = vadd.f32 0.0, %v545
        %v547 = vpop.f32.mrb[0].mxu0
        %548 = vmatprep.mubr.f32.mxu0 0.0
        %549 = vmatmul.mubr.f32.gmra.mrb[0].mxu0 %v427
        %v550 = vpop.f32.mrb[0].mxu0
        %v551 = vadd.f32 0.0, %v550
        %v552 = vpop.f32.mrb[0].mxu0
        %553 = vmatprep.mubr.f32.mxu0 0.0
        %554 = vmatmul.mubr.f32.gmra.mrb[0].mxu0 %v430
        %v555 = vpop.f32.mrb[0].mxu0
        %v556 = vadd.f32 0.0, %v555
        %v557 = vpop.f32.mrb[0].mxu0
        %558 = vmatprep.mubr.f32.mxu0 0.0
        %559 = vmatmul.mubr.f32.gmra.mrb[0].mxu0 %v433
        %v560 = vpop.f32.mrb[0].mxu0
        %v561 = vadd.f32 0.0, %v560
        %v562 = vpop.f32.mrb[0].mxu0
        %563 = vmatprep.mubr.f32.mxu0 0.0
        %564 = vmatmul.mubr.f32.gmra.mrb[0].mxu0 %v436
        %v565 = vpop.f32.mrb[0].mxu0
        %v566 = vadd.f32 0.0, %v565
        %v567 = vpop.f32.mrb[0].mxu0
        %568 = vmatprep.mubr.f32.mxu0 0.0
        %569 = vmatmul.mubr.f32.gmra.mrb[0].mxu0 %v439
        %v570 = vpop.f32.mrb[0].mxu0
        %v571 = vadd.f32 0.0, %v570
        %v572 = vpop.f32.mrb[0].mxu0
        %573 = vmatprep.mubr.f32.mxu0 0.0
        %574 = vmatmul.mubr.f32.gmra.mrb[0].mxu0 %v442
        %v575 = vpop.f32.mrb[0].mxu0
        %v576 = vadd.f32 0.0, %v575
        %v577 = vpop.f32.mrb[0].mxu0
        %578 = vmatprep.mubr.f32.mxu0 0.0
        %579 = vmatmul.mubr.f32.gmra.mrb[0].mxu0 %v445
        %v580 = vpop.f32.mrb[0].mxu0
        %v581 = vadd.f32 0.0, %v580
        %v582 = vpop.f32.mrb[0].mxu0
        %583 = vmatprep.mubr.f32.mxu0 0.0
        %584 = vmatmul.mubr.f32.gmra.mrb[0].mxu0 %v448
        %v585 = vpop.f32.mrb[0].mxu0
        %v586 = vadd.f32 0.0, %v585
        %v587 = vpop.f32.mrb[0].mxu0
        %588 = vmatprep.mubr.f32.mxu0 0.0
        %589 = vmatmul.mubr.f32.gmra.mrb[0].mxu0 %v451
        %v590 = vpop.f32.mrb[0].mxu0
        %v591 = vadd.f32 0.0, %v590
        %v592 = vpop.f32.mrb[0].mxu0
        %593 = vmatprep.mubr.f32.mxu0 0.0
        %594 = vmatmul.mubr.f32.gmra.mrb[0].mxu0 %v454
        %v595 = vpop.f32.mrb[0].mxu0
        %v596 = vadd.f32 0.0, %v595
        %v597 = vpop.f32.mrb[0].mxu0
        %598 = vmatprep.mubr.f32.mxu0 0.0
        %599 = vmatmul.mubr.f32.gmra.mrb[0].mxu0 %v457
        %v600 = vpop.f32.mrb[0].mxu0
        %v601 = vadd.f32 0.0, %v600
        %v602 = vpop.f32.mrb[0].mxu0
        %603 = vdwg.mxu0
        %v604 = vmin.f32 %v526, %v536
        %v605 = vmin.f32 %v531, %v541
        %v606 = vmin.f32 %v604, %v546
        %v607 = vmin.f32 %v605, %v551
        %v608 = vmin.f32 %v606, %v556
        %v609 = vmin.f32 %v607, %v561
        %v610 = vmin.f32 %v608, %v566
        %v611 = vmin.f32 %v609, %v571
        %v612 = vmin.f32 %v610, %v576
        %v613 = vmin.f32 %v611, %v581
        %v614 = vmin.f32 %v612, %v586
        %v615 = vmin.f32 %v613, %v591
        %v616 = vmin.f32 %v614, %v596
        %v617 = vmin.f32 %v615, %v601
        %v618 = vld [vmem:[%s392] sm:$0x1]
        %v619 = vlaneseq
        %v620 = vshrl.u32 %v619, 7
        %v621 = vadd.s32 %v620, 8
        %v622 = vlaneseq
        %v623 = vand.u32 %v622, 127
        %vm624 = vcmp.eq.f32.partialorder %v618, 0.0
        %v625 = vsel %vm624, 1, 0
        %v626 = vlaneseq
        %v627 = vshrl.u32 %v626, 7
        %v628 = vsub.s32 0, %v627
        %v629 = vrot.slane %v625, %v628
        %vm630 = vcmp.eq.s32.totalorder %v629, 1
        %v631 = vsel %vm630, 1e+30, %v616
        %v632 = vsel %vm630, 1e+30, %v617
        %vm633 = vcmp.eq.s32.totalorder %v620, %v623
        %vm634 = vcmp.eq.s32.totalorder %v621, %v623
        %v635 = vsel %vm633, 1e+30, %v631
        %v636 = vsel %vm634, 1e+30, %v632
        %vm637 = vcmask 130048
        %v638 = vsel %vm637, %v635, inf
        %639 = vmin.xlane.f32.xlu0 %v638
        %v640 = vpop.xlane.xlu0 %639
        %v641 = vsel %vm637, %v636, inf
        %642 = vmin.xlane.f32.xlu0 %v641
        %v643 = vpop.xlane.xlu0 %642
        %vm644 = vcmp.eq.f32.partialorder %v635, %v640
        %vm645 = vcmp.eq.f32.partialorder %v636, %v643
        %v646 = vsel %vm644, %v623, 16
        %v647 = vsel %vm645, %v623, 16
        %v648 = vsel %vm637, %v646, 2147483647
        %v649 = vand.u32 %v648, 65535
        %v650 = vshra.s32 %v648, 16
        %v651 = vcvt.s32.f32 %v649
        %v652 = vcvt.s32.f32 %v650
        %653 = vmin.xlane.f32.xlu0 %v652
        %v654 = vpop.xlane.xlu0 %653
        %vm655 = vcmp.eq.f32.partialorder %v652, %v654
        %v656 = vsel %vm655, %v651, inf
        %657 = vmin.xlane.f32.xlu0 %v656
        %v658 = vpop.xlane.xlu0 %657
        %v659 = vcvt.f32.s32 %v658
        %v660 = vcvt.f32.s32 %v654
        %v661 = vshll.u32 %v660, 16
        %v662 = vadd.s32 %v661, %v659
        %v663 = vsel %vm637, %v647, 2147483647
        %v664 = vand.u32 %v663, 65535
        %v665 = vshra.s32 %v663, 16
        %v666 = vcvt.s32.f32 %v664
        %v667 = vcvt.s32.f32 %v665
        %668 = vmin.xlane.f32.xlu0 %v667
        %v669 = vpop.xlane.xlu0 %668
        %vm670 = vcmp.eq.f32.partialorder %v667, %v669
        %v671 = vsel %vm670, %v666, inf
        %672 = vmin.xlane.f32.xlu0 %v671
        %v673 = vpop.xlane.xlu0 %672
        %v674 = vcvt.f32.s32 %v673
        %v675 = vcvt.f32.s32 %v669
        %v676 = vshll.u32 %v675, 16
        %v677 = vadd.s32 %v676, %v674
        %vm678 = vcmp.eq.s32.totalorder %v623, %v662
        %vm679 = vcmp.eq.s32.totalorder %v623, %v677
        %v680 = vsel %vm678, 1.0, 0.0
        %v681 = vsel %vm679, 1.0, 0.0
        %v682 = vsel %vm678, 1e+30, %v635
        %v683 = vsel %vm679, 1e+30, %v636
        %v684 = vsel %vm637, %v682, inf
        %685 = vmin.xlane.f32.xlu0 %v684
        %v686 = vpop.xlane.xlu0 %685
        %v687 = vsel %vm637, %v683, inf
        %688 = vmin.xlane.f32.xlu0 %v687
        %v689 = vpop.xlane.xlu0 %688
        %vm690 = vcmp.eq.f32.partialorder %v682, %v686
        %vm691 = vcmp.eq.f32.partialorder %v683, %v689
        %v692 = vsel %vm690, %v623, 16
        %v693 = vsel %vm691, %v623, 16
        %v694 = vsel %vm637, %v692, 2147483647
        %v695 = vand.u32 %v694, 65535
        %v696 = vshra.s32 %v694, 16
        %v697 = vcvt.s32.f32 %v695
        %v698 = vcvt.s32.f32 %v696
        %699 = vmin.xlane.f32.xlu0 %v698
        %v700 = vpop.xlane.xlu0 %699
        %vm701 = vcmp.eq.f32.partialorder %v698, %v700
        %v702 = vsel %vm701, %v697, inf
        %703 = vmin.xlane.f32.xlu0 %v702
        %v704 = vpop.xlane.xlu0 %703
        %v705 = vcvt.f32.s32 %v704
        %v706 = vcvt.f32.s32 %v700
        %v707 = vshll.u32 %v706, 16
        %v708 = vadd.s32 %v707, %v705
        %v709 = vsel %vm637, %v693, 2147483647
        %v710 = vand.u32 %v709, 65535
        %v711 = vshra.s32 %v709, 16
        %v712 = vcvt.s32.f32 %v710
        %v713 = vcvt.s32.f32 %v711
        %714 = vmin.xlane.f32.xlu0 %v713
        %v715 = vpop.xlane.xlu0 %714
        %vm716 = vcmp.eq.f32.partialorder %v713, %v715
        %v717 = vsel %vm716, %v712, inf
        %718 = vmin.xlane.f32.xlu0 %v717
        %v719 = vpop.xlane.xlu0 %718
        %v720 = vcvt.f32.s32 %v719
        %v721 = vcvt.f32.s32 %v715
        %v722 = vshll.u32 %v721, 16
        %v723 = vadd.s32 %v722, %v720
        %vm724 = vcmp.eq.s32.totalorder %v623, %v708
        %vm725 = vcmp.eq.s32.totalorder %v623, %v723
        %v726 = vsel %vm724, 1.0, %v680
        %v727 = vsel %vm725, 1.0, %v681
        %v728 = vsel %vm724, 1e+30, %v682
        %v729 = vsel %vm725, 1e+30, %v683
        %v730 = vsel %vm637, %v728, inf
        %731 = vmin.xlane.f32.xlu0 %v730
        %v732 = vpop.xlane.xlu0 %731
        %v733 = vsel %vm637, %v729, inf
        %734 = vmin.xlane.f32.xlu0 %v733
        %v735 = vpop.xlane.xlu0 %734
        %vm736 = vcmp.eq.f32.partialorder %v728, %v732
        %vm737 = vcmp.eq.f32.partialorder %v729, %v735
        %v738 = vsel %vm736, %v623, 16
        %v739 = vsel %vm737, %v623, 16
        %v740 = vsel %vm637, %v738, 2147483647
        %v741 = vand.u32 %v740, 65535
        %v742 = vshra.s32 %v740, 16
        %v743 = vcvt.s32.f32 %v741
        %v744 = vcvt.s32.f32 %v742
        %745 = vmin.xlane.f32.xlu0 %v744
        %v746 = vpop.xlane.xlu0 %745
        %vm747 = vcmp.eq.f32.partialorder %v744, %v746
        %v748 = vsel %vm747, %v743, inf
        %749 = vmin.xlane.f32.xlu0 %v748
        %v750 = vpop.xlane.xlu0 %749
        %v751 = vcvt.f32.s32 %v750
        %v752 = vcvt.f32.s32 %v746
        %v753 = vshll.u32 %v752, 16
        %v754 = vadd.s32 %v753, %v751
        %v755 = vsel %vm637, %v739, 2147483647
        %v756 = vand.u32 %v755, 65535
        %v757 = vshra.s32 %v755, 16
        %v758 = vcvt.s32.f32 %v756
        %v759 = vcvt.s32.f32 %v757
        %760 = vmin.xlane.f32.xlu0 %v759
        %v761 = vpop.xlane.xlu0 %760
        %vm762 = vcmp.eq.f32.partialorder %v759, %v761
        %v763 = vsel %vm762, %v758, inf
        %764 = vmin.xlane.f32.xlu0 %v763
        %v765 = vpop.xlane.xlu0 %764
        %v766 = vcvt.f32.s32 %v765
        %v767 = vcvt.f32.s32 %v761
        %v768 = vshll.u32 %v767, 16
        %v769 = vadd.s32 %v768, %v766
        %vm770 = vcmp.eq.s32.totalorder %v623, %v754
        %vm771 = vcmp.eq.s32.totalorder %v623, %v769
        %v772 = vsel %vm770, 1.0, %v726
        %v773 = vsel %vm771, 1.0, %v727
        %v774 = vsel %vm770, 1e+30, %v728
        %v775 = vsel %vm771, 1e+30, %v729
        %v776 = vsel %vm637, %v774, inf
        %777 = vmin.xlane.f32.xlu0 %v776
        %v778 = vpop.xlane.xlu0 %777
        %v779 = vsel %vm637, %v775, inf
        %780 = vmin.xlane.f32.xlu0 %v779
        %v781 = vpop.xlane.xlu0 %780
        %vm782 = vcmp.eq.f32.partialorder %v774, %v778
        %vm783 = vcmp.eq.f32.partialorder %v775, %v781
        %v784 = vsel %vm782, %v623, 16
        %v785 = vsel %vm783, %v623, 16
        %v786 = vsel %vm637, %v784, 2147483647
        %v787 = vand.u32 %v786, 65535
        %v788 = vshra.s32 %v786, 16
        %v789 = vcvt.s32.f32 %v787
        %v790 = vcvt.s32.f32 %v788
        %791 = vmin.xlane.f32.xlu0 %v790
        %v792 = vpop.xlane.xlu0 %791
        %vm793 = vcmp.eq.f32.partialorder %v790, %v792
        %v794 = vsel %vm793, %v789, inf
        %795 = vmin.xlane.f32.xlu0 %v794
        %v796 = vpop.xlane.xlu0 %795
        %v797 = vcvt.f32.s32 %v796
        %v798 = vcvt.f32.s32 %v792
        %v799 = vshll.u32 %v798, 16
        %v800 = vadd.s32 %v799, %v797
        %v801 = vsel %vm637, %v785, 2147483647
        %v802 = vand.u32 %v801, 65535
        %v803 = vshra.s32 %v801, 16
        %v804 = vcvt.s32.f32 %v802
        %v805 = vcvt.s32.f32 %v803
        %806 = vmin.xlane.f32.xlu0 %v805
        %v807 = vpop.xlane.xlu0 %806
        %vm808 = vcmp.eq.f32.partialorder %v805, %v807
        %v809 = vsel %vm808, %v804, inf
        %810 = vmin.xlane.f32.xlu0 %v809
        %v811 = vpop.xlane.xlu0 %810
        %v812 = vcvt.f32.s32 %v811
        %v813 = vcvt.f32.s32 %v807
        %v814 = vshll.u32 %v813, 16
        %v815 = vadd.s32 %v814, %v812
        %vm816 = vcmp.eq.s32.totalorder %v623, %v800
        %vm817 = vcmp.eq.s32.totalorder %v623, %v815
        %v818 = vsel %vm816, 1.0, %v772
        %v819 = vsel %vm817, 1.0, %v773
        %820 = vst.msk [vmem:[%s368] sm:$0xff] %vm637, %v818
        %821 = vst.msk [vmem:[%s368 + $0x8] sm:$0xff] %vm637, %v819
        %v822 = vld [vmem:[%s389] sm:$0xff]
        %v823 = vld [vmem:[%s389 + $0x8] sm:$0xff]
        %824 = vxpose.xlu0.b32.start [1/16] %v618, 128
        %825 = vxpose.xlu0.b32.cont [2/16] 0.0, 128
        %826 = vxpose.xlu0.b32.cont [3/16] 0.0, 128
        %827 = vxpose.xlu0.b32.cont [4/16] 0.0, 128
        %828 = vxpose.xlu0.b32.cont [5/16] 0.0, 128
        %829 = vxpose.xlu0.b32.cont [6/16] 0.0, 128
        %830 = vxpose.xlu0.b32.cont [7/16] 0.0, 128
        %831 = vxpose.xlu0.b32.cont [8/16] 0.0, 128
        %832 = vxpose.xlu0.b32.cont [9/16] 0.0, 128
        %833 = vxpose.xlu0.b32.cont [10/16] 0.0, 128
        %834 = vxpose.xlu0.b32.cont [11/16] 0.0, 128
        %835 = vxpose.xlu0.b32.cont [12/16] 0.0, 128
        %836 = vxpose.xlu0.b32.cont [13/16] 0.0, 128
        %837 = vxpose.xlu0.b32.cont [14/16] 0.0, 128
        %838 = vxpose.xlu0.b32.cont [15/16] 0.0, 128
        %839 = vxpose.xlu0.b32.end [16/16] 0.0, 128
        %v840 = vpop.trf.xlu0
        %v841 = vpop.trf.xlu0
        %v842 = vpop.trf.xlu0
        %v843 = vpop.trf.xlu0
        %v844 = vpop.trf.xlu0
        %v845 = vpop.trf.xlu0
        %v846 = vpop.trf.xlu0
        %v847 = vpop.trf.xlu0
        %v848 = vpop.trf.xlu0
        %v849 = vpop.trf.xlu0
        %v850 = vpop.trf.xlu0
        %v851 = vpop.trf.xlu0
        %v852 = vpop.trf.xlu0
        %v853 = vpop.trf.xlu0
        %v854 = vpop.trf.xlu0
        %v855 = vpop.trf.xlu0
        %857 = vset.pattern.permute.xlu0 0
        %858 = vperm.xlu0 %857, %v840
        %v859 = vpop.permute.xlu0 %858
        %862 = vset.pattern.permute.xlu0 0
        %863 = vperm.xlu0 %862, %v841
        %v864 = vpop.permute.xlu0 %863
        %v866 = vmul.f32 %v818, %v859
        %v867 = vmul.f32 %v819, %v864
        %v869 = vlaneseq
        %v870 = vshrl.u32 %v869, 7
        %v871 = vsub.s32 0, %v870
        %v872 = vrot.slane %v618, %v871
        %v874 = vmul.f32 %v866, %v872
        %v875 = vmul.f32 %v867, %v872
        %v876 = vsel %vm637, %v874, 0.0
        %v877 = vsel %vm637, %v875, 0.0
        %v878 = vadd.f32 %v876, %v877
        %v879 = vrot.slane %v878, 4
        %v880 = vadd.f32 %v878, %v879
        %v881 = vrot.slane %v880, 2
        %v882 = vadd.f32 %v880, %v881
        %v883 = vrot.slane %v882, 1
        %v884 = vadd.f32 %v882, %v883
        %885 = vxpose.xlu0.b32.start [1/16] %v884, 128
        %886 = vxpose.xlu0.b32.cont [2/16] 0.0, 128
        %887 = vxpose.xlu0.b32.cont [3/16] 0.0, 128
        %888 = vxpose.xlu0.b32.cont [4/16] 0.0, 128
        %889 = vxpose.xlu0.b32.cont [5/16] 0.0, 128
        %890 = vxpose.xlu0.b32.cont [6/16] 0.0, 128
        %891 = vxpose.xlu0.b32.cont [7/16] 0.0, 128
        %892 = vxpose.xlu0.b32.cont [8/16] 0.0, 128
        %893 = vxpose.xlu0.b32.cont [9/16] 0.0, 128
        %894 = vxpose.xlu0.b32.cont [10/16] 0.0, 128
        %895 = vxpose.xlu0.b32.cont [11/16] 0.0, 128
        %896 = vxpose.xlu0.b32.cont [12/16] 0.0, 128
        %897 = vxpose.xlu0.b32.cont [13/16] 0.0, 128
        %898 = vxpose.xlu0.b32.cont [14/16] 0.0, 128
        %899 = vxpose.xlu0.b32.cont [15/16] 0.0, 128
        %900 = vxpose.xlu0.b32.end [16/16] 0.0, 128
        %v901 = vpop.trf.xlu0
        %v902 = vpop.trf.xlu0
        %v903 = vpop.trf.xlu0
        %v904 = vpop.trf.xlu0
        %v905 = vpop.trf.xlu0
        %v906 = vpop.trf.xlu0
        %v907 = vpop.trf.xlu0
        %v908 = vpop.trf.xlu0
        %v909 = vpop.trf.xlu0
        %v910 = vpop.trf.xlu0
        %v911 = vpop.trf.xlu0
        %v912 = vpop.trf.xlu0
        %v913 = vpop.trf.xlu0
        %v914 = vpop.trf.xlu0
        %v915 = vpop.trf.xlu0
        %v916 = vpop.trf.xlu0
        %v917 = vld [vmem:[%s4] sm:$0xff]
        %v918 = vld [vmem:[%s4 + $0x8] sm:$0xff]
        %v919 = vld [vmem:[%s4 + $0x10] sm:$0xff]
        %v920 = vld [vmem:[%s4 + $0x18] sm:$0xff]
        %vm921 = vcmask 261120
        %v923 = vsel %vm921, %v822, 0
        %v926 = vsel %vm921, %v823, 0
        %928 = vmatprep.subr.mxu0 0.0
        %929 = vmatpush1.msra.mxu0 %v917
        %930 = vmatprep.subr.mxu0 0.0
        %931 = vmatpush1.msra.mxu0 %v918
        %932 = vmatprep.subr.mxu0 0.0
        %933 = vmatpush1.msra.mxu0 %v919
        %934 = vmatprep.subr.mxu0 0.0
        %935 = vmatpush1.msra.mxu0 %v920
        %936 = vmatprep.subr.mxu0 0.0
        %937 = vmatpush1.msra.mxu0 0.0
        %938 = vmatprep.subr.mxu0 0.0
        %939 = vmatpush1.msra.mxu0 0.0
        %940 = vmatprep.subr.mxu0 0.0
        %941 = vmatpush1.msra.mxu0 0.0
        %942 = vmatprep.subr.mxu0 0.0
        %943 = vmatpush1.msra.mxu0 0.0
        %944 = vmatprep.subr.mxu0 0.0
        %945 = vmatpush1.msra.mxu0 0.0
        %946 = vmatprep.subr.mxu0 0.0
        %947 = vmatpush1.msra.mxu0 0.0
        %948 = vmatprep.subr.mxu0 0.0
        %949 = vmatpush1.msra.mxu0 0.0
        %950 = vmatprep.subr.mxu0 0.0
        %951 = vmatpush1.msra.mxu0 0.0
        %952 = vmatprep.subr.mxu0 0.0
        %953 = vmatpush1.msra.mxu0 0.0
        %954 = vmatprep.subr.mxu0 0.0
        %955 = vmatpush1.msra.mxu0 0.0
        %956 = vmatprep.subr.mxu0 0.0
        %957 = vmatpush1.msra.mxu0 0.0
        %958 = vmatprep.subr.mxu0 0.0
        %959 = vmatpush1.msra.mxu0 0.0
        %960 = vmatprep.subr.mxu0 0.0
        %961 = vmatpush1.msra.mxu0 0.0
        %962 = vmatprep.subr.mxu0 0.0
        %963 = vmatpush1.msra.mxu0 0.0
        %964 = vmatprep.subr.mxu0 0.0
        %965 = vmatpush1.msra.mxu0 0.0
        %966 = vmatprep.subr.mxu0 0.0
        %967 = vmatpush1.msra.mxu0 0.0
        %968 = vmatprep.subr.mxu0 0.0
        %969 = vmatpush1.msra.mxu0 0.0
        %970 = vmatprep.subr.mxu0 0.0
        %971 = vmatpush1.msra.mxu0 0.0
        %972 = vmatprep.subr.mxu0 0.0
        %973 = vmatpush1.msra.mxu0 0.0
        %974 = vmatprep.subr.mxu0 0.0
        %975 = vmatpush1.msra.mxu0 0.0
        %976 = vmatprep.subr.mxu0 0.0
        %977 = vmatpush1.msra.mxu0 0.0
        %978 = vmatprep.subr.mxu0 0.0
        %979 = vmatpush1.msra.mxu0 0.0
        %980 = vmatprep.subr.mxu0 0.0
        %981 = vmatpush1.msra.mxu0 0.0
        %982 = vmatprep.subr.mxu0 0.0
        %983 = vmatpush1.msra.mxu0 0.0
        %984 = vmatprep.subr.mxu0 0.0
        %985 = vmatpush1.msra.mxu0 0.0
        %986 = vmatprep.subr.mxu0 0.0
        %987 = vmatpush1.msra.mxu0 0.0
        %988 = vmatprep.subr.mxu0 0.0
        %989 = vmatpush1.msra.mxu0 0.0
        %990 = vmatprep.subr.mxu0 0.0
        %991 = vmatpush1.msra.mxu0 0.0
        %992 = vmatprep.mubr.f32.mxu0 0.0
        %993 = vmatmul.mubr.f32.gmra.mrb[0].mxu0 %v923
        %v994 = vpop.f32.mrb[0].mxu0
        %v995 = vadd.f32 0.0, %v994
        %v996 = vpop.f32.mrb[0].mxu0
        %997 = vmatprep.mubr.f32.mxu0 0.0
        %998 = vmatmul.mubr.f32.gmra.mrb[0].mxu0 %v926
        %v999 = vpop.f32.mrb[0].mxu0
        %v1000 = vadd.f32 0.0, %v999
        %v1001 = vpop.f32.mrb[0].mxu0
        %1002 = vdwg.mxu0
        %v1005 = vcombine.high %v995, %v995
        %v1007 = vunpack.c.l.s4 1966171168
        %v1008 = vunpack.c.0.s8 %v1007
        %v1009 = vlaneseq
        %v1010 = vshrl.u32 %v1009, 7
        %v1011 = vsub.s32 %v1008, %v1010
        %v1012 = vrot.slane %v995, %v1011
        %v1014 = vunpack.c.l.s4 1966171168
        %v1015 = vunpack.c.0.s8 %v1014
        %v1016 = vlaneseq
        %v1017 = vshrl.u32 %v1016, 7
        %v1018 = vsub.s32 %v1015, %v1017
        %v1019 = vrot.slane %v1005, %v1018
        %v1020 = vcombine.high %v1012, %v1012
        %v1021 = vcombine.high %v1019, %v1019
        %v1023 = vunpack.c.l.s4 1966171168
        %v1024 = vunpack.c.0.s8 %v1023
        %v1025 = vlaneseq
        %v1026 = vshrl.u32 %v1025, 7
        %v1027 = vsub.s32 %v1024, %v1026
        %v1028 = vrot.slane %v1012, %v1027
        %v1030 = vunpack.c.l.s4 1966171168
        %v1031 = vunpack.c.0.s8 %v1030
        %v1032 = vlaneseq
        %v1033 = vshrl.u32 %v1032, 7
        %v1034 = vsub.s32 %v1031, %v1033
        %v1035 = vrot.slane %v1019, %v1034
        %v1037 = vunpack.c.l.s4 1966171168
        %v1038 = vunpack.c.0.s8 %v1037
        %v1039 = vlaneseq
        %v1040 = vshrl.u32 %v1039, 7
        %v1041 = vsub.s32 %v1038, %v1040
        %v1042 = vrot.slane %v1020, %v1041
        %v1044 = vunpack.c.l.s4 1966171168
        %v1045 = vunpack.c.0.s8 %v1044
        %v1046 = vlaneseq
        %v1047 = vshrl.u32 %v1046, 7
        %v1048 = vsub.s32 %v1045, %v1047
        %v1049 = vrot.slane %v1021, %v1048
        %v1050 = vcombine.high %v1028, %v1028
        %v1051 = vcombine.high %v1035, %v1035
        %v1052 = vcombine.high %v1042, %v1042
        %v1053 = vcombine.high %v1049, %v1049
        %v1054 = vcombine.high %v1000, %v1000
        %v1056 = vunpack.c.l.s4 1966171168
        %v1057 = vunpack.c.0.s8 %v1056
        %v1058 = vlaneseq
        %v1059 = vshrl.u32 %v1058, 7
        %v1060 = vsub.s32 %v1057, %v1059
        %v1061 = vrot.slane %v1000, %v1060
        %v1063 = vunpack.c.l.s4 1966171168
        %v1064 = vunpack.c.0.s8 %v1063
        %v1065 = vlaneseq
        %v1066 = vshrl.u32 %v1065, 7
        %v1067 = vsub.s32 %v1064, %v1066
        %v1068 = vrot.slane %v1054, %v1067
        %v1069 = vcombine.high %v1061, %v1061
        %v1070 = vcombine.high %v1068, %v1068
        %v1072 = vunpack.c.l.s4 1966171168
        %v1073 = vunpack.c.0.s8 %v1072
        %v1074 = vlaneseq
        %v1075 = vshrl.u32 %v1074, 7
        %v1076 = vsub.s32 %v1073, %v1075
        %v1077 = vrot.slane %v1061, %v1076
        %v1079 = vunpack.c.l.s4 1966171168
        %v1080 = vunpack.c.0.s8 %v1079
        %v1081 = vlaneseq
        %v1082 = vshrl.u32 %v1081, 7
        %v1083 = vsub.s32 %v1080, %v1082
        %v1084 = vrot.slane %v1068, %v1083
        %v1086 = vunpack.c.l.s4 1966171168
        %v1087 = vunpack.c.0.s8 %v1086
        %v1088 = vlaneseq
        %v1089 = vshrl.u32 %v1088, 7
        %v1090 = vsub.s32 %v1087, %v1089
        %v1091 = vrot.slane %v1069, %v1090
        %v1093 = vunpack.c.l.s4 1966171168
        %v1094 = vunpack.c.0.s8 %v1093
        %v1095 = vlaneseq
        %v1096 = vshrl.u32 %v1095, 7
        %v1097 = vsub.s32 %v1094, %v1096
        %v1098 = vrot.slane %v1070, %v1097
        %v1099 = vcombine.high %v1077, %v1077
        %v1100 = vcombine.high %v1084, %v1084
        %v1101 = vcombine.high %v1091, %v1091
        %v1102 = vcombine.high %v1098, %v1098
        %v1103 = vlaneseq
        %v1104 = vshrl.u32 %v1103, 7
        %v1105 = vsub.s32 0, %v1104
        %v1106 = vrot.slane %v1028, %v1105
        %v1107 = vlaneseq
        %v1108 = vshrl.u32 %v1107, 7
        %v1109 = vsub.s32 0, %v1108
        %v1110 = vrot.slane %v1042, %v1109
        %v1111 = vlaneseq
        %v1112 = vshrl.u32 %v1111, 7
        %v1113 = vsub.s32 0, %v1112
        %v1114 = vrot.slane %v1050, %v1113
        %v1115 = vlaneseq
        %v1116 = vshrl.u32 %v1115, 7
        %v1117 = vsub.s32 0, %v1116
        %v1118 = vrot.slane %v1052, %v1117
        %v1119 = vlaneseq
        %v1120 = vshrl.u32 %v1119, 7
        %v1121 = vsub.s32 0, %v1120
        %v1122 = vrot.slane %v1035, %v1121
        %v1123 = vlaneseq
        %v1124 = vshrl.u32 %v1123, 7
        %v1125 = vsub.s32 0, %v1124
        %v1126 = vrot.slane %v1049, %v1125
        %v1127 = vlaneseq
        %v1128 = vshrl.u32 %v1127, 7
        %v1129 = vsub.s32 0, %v1128
        %v1130 = vrot.slane %v1051, %v1129
        %v1131 = vlaneseq
        %v1132 = vshrl.u32 %v1131, 7
        %v1133 = vsub.s32 0, %v1132
        %v1134 = vrot.slane %v1053, %v1133
        %v1135 = vlaneseq
        %v1136 = vshrl.u32 %v1135, 7
        %v1137 = vsub.s32 0, %v1136
        %v1138 = vrot.slane %v1077, %v1137
        %v1139 = vlaneseq
        %v1140 = vshrl.u32 %v1139, 7
        %v1141 = vsub.s32 0, %v1140
        %v1142 = vrot.slane %v1091, %v1141
        %v1143 = vlaneseq
        %v1144 = vshrl.u32 %v1143, 7
        %v1145 = vsub.s32 0, %v1144
        %v1146 = vrot.slane %v1099, %v1145
        %v1147 = vlaneseq
        %v1148 = vshrl.u32 %v1147, 7
        %v1149 = vsub.s32 0, %v1148
        %v1150 = vrot.slane %v1101, %v1149
        %v1151 = vlaneseq
        %v1152 = vshrl.u32 %v1151, 7
        %v1153 = vsub.s32 0, %v1152
        %v1154 = vrot.slane %v1084, %v1153
        %v1155 = vlaneseq
        %v1156 = vshrl.u32 %v1155, 7
        %v1157 = vsub.s32 0, %v1156
        %v1158 = vrot.slane %v1098, %v1157
        %v1159 = vlaneseq
        %v1160 = vshrl.u32 %v1159, 7
        %v1161 = vsub.s32 0, %v1160
        %v1162 = vrot.slane %v1100, %v1161
        %v1163 = vlaneseq
        %v1164 = vshrl.u32 %v1163, 7
        %v1165 = vsub.s32 0, %v1164
        %v1166 = vrot.slane %v1102, %v1165
        %1167 = vrot.lane.b32.xlu0 %v1106, 96
        %v1168 = vpop.permute.xlu0 %1167
        %1169 = vrot.lane.b32.xlu0 %v1110, 96
        %v1170 = vpop.permute.xlu0 %1169
        %1171 = vrot.lane.b32.xlu0 %v1114, 96
        %v1172 = vpop.permute.xlu0 %1171
        %1173 = vrot.lane.b32.xlu0 %v1118, 96
        %v1174 = vpop.permute.xlu0 %1173
        %1175 = vrot.lane.b32.xlu0 %v1122, 96
        %v1176 = vpop.permute.xlu0 %1175
        %1177 = vrot.lane.b32.xlu0 %v1126, 96
        %v1178 = vpop.permute.xlu0 %1177
        %1179 = vrot.lane.b32.xlu0 %v1130, 96
        %v1180 = vpop.permute.xlu0 %1179
        %1181 = vrot.lane.b32.xlu0 %v1134, 96
        %v1182 = vpop.permute.xlu0 %1181
        %1183 = vrot.lane.b32.xlu0 %v1138, 96
        %v1184 = vpop.permute.xlu0 %1183
        %1185 = vrot.lane.b32.xlu0 %v1142, 96
        %v1186 = vpop.permute.xlu0 %1185
        %1187 = vrot.lane.b32.xlu0 %v1146, 96
        %v1188 = vpop.permute.xlu0 %1187
        %1189 = vrot.lane.b32.xlu0 %v1150, 96
        %v1190 = vpop.permute.xlu0 %1189
        %1191 = vrot.lane.b32.xlu0 %v1154, 96
        %v1192 = vpop.permute.xlu0 %1191
        %1193 = vrot.lane.b32.xlu0 %v1158, 96
        %v1194 = vpop.permute.xlu0 %1193
        %1195 = vrot.lane.b32.xlu0 %v1162, 96
        %v1196 = vpop.permute.xlu0 %1195
        %1197 = vrot.lane.b32.xlu0 %v1166, 96
        %v1198 = vpop.permute.xlu0 %1197
        %v1215 = vadd.f32 %v995, %v1168
        %v1216 = vadd.f32 %v1000, %v1168
        %v1217 = vadd.f32 %v995, %v1170
        %v1218 = vadd.f32 %v1000, %v1170
        %v1219 = vadd.f32 %v995, %v1172
        %v1220 = vadd.f32 %v1000, %v1172
        %v1221 = vadd.f32 %v995, %v1174
        %v1222 = vadd.f32 %v1000, %v1174
        %v1223 = vadd.f32 %v995, %v1176
        %v1224 = vadd.f32 %v1000, %v1176
        %v1225 = vadd.f32 %v995, %v1178
        %v1226 = vadd.f32 %v1000, %v1178
        %v1227 = vadd.f32 %v995, %v1180
        %v1228 = vadd.f32 %v1000, %v1180
        %v1229 = vadd.f32 %v995, %v1182
        %v1230 = vadd.f32 %v1000, %v1182
        %v1231 = vadd.f32 %v995, %v1184
        %v1232 = vadd.f32 %v1000, %v1184
        %v1233 = vadd.f32 %v995, %v1186
        %v1234 = vadd.f32 %v1000, %v1186
        %v1235 = vadd.f32 %v995, %v1188
        %v1236 = vadd.f32 %v1000, %v1188
        %v1237 = vadd.f32 %v995, %v1190
        %v1238 = vadd.f32 %v1000, %v1190
        %v1239 = vadd.f32 %v995, %v1192
        %v1240 = vadd.f32 %v1000, %v1192
        %v1241 = vadd.f32 %v995, %v1194
        %v1242 = vadd.f32 %v1000, %v1194
        %v1243 = vadd.f32 %v995, %v1196
        %v1244 = vadd.f32 %v1000, %v1196
        %v1245 = vadd.f32 %v995, %v1198
        %v1246 = vadd.f32 %v1000, %v1198
        %1247 = vrot.lane.b32.xlu0 %v995, 96
        %v1248 = vpop.permute.xlu0 %1247
        %1249 = vrot.lane.b32.xlu0 %v1000, 96
        %v1250 = vpop.permute.xlu0 %1249
        %v1253 = vsub.f32 %v1215, %v1248
        %v1254 = vsub.f32 %v1216, %v1250
        %v1255 = vsub.f32 %v1217, %v1248
        %v1256 = vsub.f32 %v1218, %v1250
        %v1257 = vsub.f32 %v1219, %v1248
        %v1258 = vsub.f32 %v1220, %v1250
        %v1259 = vsub.f32 %v1221, %v1248
        %v1260 = vsub.f32 %v1222, %v1250
        %v1261 = vsub.f32 %v1223, %v1248
        %v1262 = vsub.f32 %v1224, %v1250
        %v1263 = vsub.f32 %v1225, %v1248
        %v1264 = vsub.f32 %v1226, %v1250
        %v1265 = vsub.f32 %v1227, %v1248
        %v1266 = vsub.f32 %v1228, %v1250
        %v1267 = vsub.f32 %v1229, %v1248
        %v1268 = vsub.f32 %v1230, %v1250
        %v1269 = vsub.f32 %v1231, %v1248
        %v1270 = vsub.f32 %v1232, %v1250
        %v1271 = vsub.f32 %v1233, %v1248
        %v1272 = vsub.f32 %v1234, %v1250
        %v1273 = vsub.f32 %v1235, %v1248
        %v1274 = vsub.f32 %v1236, %v1250
        %v1275 = vsub.f32 %v1237, %v1248
        %v1276 = vsub.f32 %v1238, %v1250
        %v1277 = vsub.f32 %v1239, %v1248
        %v1278 = vsub.f32 %v1240, %v1250
        %v1279 = vsub.f32 %v1241, %v1248
        %v1280 = vsub.f32 %v1242, %v1250
        %v1281 = vsub.f32 %v1243, %v1248
        %v1282 = vsub.f32 %v1244, %v1250
        %v1283 = vsub.f32 %v1245, %v1248
        %v1284 = vsub.f32 %v1246, %v1250
        %v1285 = vld [vmem:[%s5] sm:$0x1]
        %v1287 = vlaneseq
        %v1288 = vshrl.u32 %v1287, 7
        %v1289 = vsub.s32 0, %v1288
        %v1290 = vrot.slane %v1285, %v1289
        %v1292 = vadd.f32 %v1253, %v1290
        %v1293 = vadd.f32 %v1254, %v1290
        %v1294 = vadd.f32 %v1255, %v1290
        %v1295 = vadd.f32 %v1256, %v1290
        %v1296 = vadd.f32 %v1257, %v1290
        %v1297 = vadd.f32 %v1258, %v1290
        %v1298 = vadd.f32 %v1259, %v1290
        %v1299 = vadd.f32 %v1260, %v1290
        %v1300 = vadd.f32 %v1261, %v1290
        %v1301 = vadd.f32 %v1262, %v1290
        %v1302 = vadd.f32 %v1263, %v1290
        %v1303 = vadd.f32 %v1264, %v1290
        %v1304 = vadd.f32 %v1265, %v1290
        %v1305 = vadd.f32 %v1266, %v1290
        %v1306 = vadd.f32 %v1267, %v1290
        %v1307 = vadd.f32 %v1268, %v1290
        %v1308 = vadd.f32 %v1269, %v1290
        %v1309 = vadd.f32 %v1270, %v1290
        %v1310 = vadd.f32 %v1271, %v1290
        %v1311 = vadd.f32 %v1272, %v1290
        %v1312 = vadd.f32 %v1273, %v1290
        %v1313 = vadd.f32 %v1274, %v1290
        %v1314 = vadd.f32 %v1275, %v1290
        %v1315 = vadd.f32 %v1276, %v1290
        %v1316 = vadd.f32 %v1277, %v1290
        %v1317 = vadd.f32 %v1278, %v1290
        %v1318 = vadd.f32 %v1279, %v1290
        %v1319 = vadd.f32 %v1280, %v1290
        %v1320 = vadd.f32 %v1281, %v1290
        %v1321 = vadd.f32 %v1282, %v1290
        %v1322 = vadd.f32 %v1283, %v1290
        %v1323 = vadd.f32 %v1284, %v1290
        %v1324 = vmax.f32 %v1292, 0.0
        %v1325 = vmax.f32 %v1293, 0.0
        %v1326 = vmax.f32 %v1294, 0.0
        %v1327 = vmax.f32 %v1295, 0.0
        %v1328 = vmax.f32 %v1296, 0.0
        %v1329 = vmax.f32 %v1297, 0.0
        %v1330 = vmax.f32 %v1298, 0.0
        %v1331 = vmax.f32 %v1299, 0.0
        %v1332 = vmax.f32 %v1300, 0.0
        %v1333 = vmax.f32 %v1301, 0.0
        %v1334 = vmax.f32 %v1302, 0.0
        %v1335 = vmax.f32 %v1303, 0.0
        %v1336 = vmax.f32 %v1304, 0.0
        %v1337 = vmax.f32 %v1305, 0.0
        %v1338 = vmax.f32 %v1306, 0.0
        %v1339 = vmax.f32 %v1307, 0.0
        %v1340 = vmax.f32 %v1308, 0.0
        %v1341 = vmax.f32 %v1309, 0.0
        %v1342 = vmax.f32 %v1310, 0.0
        %v1343 = vmax.f32 %v1311, 0.0
        %v1344 = vmax.f32 %v1312, 0.0
        %v1345 = vmax.f32 %v1313, 0.0
        %v1346 = vmax.f32 %v1314, 0.0
        %v1347 = vmax.f32 %v1315, 0.0
        %v1348 = vmax.f32 %v1316, 0.0
        %v1349 = vmax.f32 %v1317, 0.0
        %v1350 = vmax.f32 %v1318, 0.0
        %v1351 = vmax.f32 %v1319, 0.0
        %v1352 = vmax.f32 %v1320, 0.0
        %v1353 = vmax.f32 %v1321, 0.0
        %v1354 = vmax.f32 %v1322, 0.0
        %v1355 = vmax.f32 %v1323, 0.0
        %v1356 = vlaneseq
        %v1357 = vshrl.u32 %v1356, 7
        %v1358 = vsub.s32 0, %v1357
        %v1359 = vrot.slane %v874, %v1358
        %1361 = vbcast.lane.b32.xlu0 %v1359, 256
        %v1362 = vpop.permute.xlu0 %1361
        %s1364 = sor.u32 256, 8
        %1365 = vbcast.lane.b32.xlu0 %v1359, %s1364
        %v1366 = vpop.permute.xlu0 %1365
        %v1367 = vlaneseq
        %v1368 = vshrl.u32 %v1367, 7
        %v1369 = vsub.s32 1, %v1368
        %v1370 = vrot.slane %v874, %v1369
        %1372 = vbcast.lane.b32.xlu0 %v1370, 256
        %v1373 = vpop.permute.xlu0 %1372
        %s1375 = sor.u32 256, 8
        %1376 = vbcast.lane.b32.xlu0 %v1370, %s1375
        %v1377 = vpop.permute.xlu0 %1376
        %v1378 = vlaneseq
        %v1379 = vshrl.u32 %v1378, 7
        %v1380 = vsub.s32 2, %v1379
        %v1381 = vrot.slane %v874, %v1380
        %1383 = vbcast.lane.b32.xlu0 %v1381, 256
        %v1384 = vpop.permute.xlu0 %1383
        %s1386 = sor.u32 256, 8
        %1387 = vbcast.lane.b32.xlu0 %v1381, %s1386
        %v1388 = vpop.permute.xlu0 %1387
        %v1389 = vlaneseq
        %v1390 = vshrl.u32 %v1389, 7
        %v1391 = vsub.s32 3, %v1390
        %v1392 = vrot.slane %v874, %v1391
        %1394 = vbcast.lane.b32.xlu0 %v1392, 256
        %v1395 = vpop.permute.xlu0 %1394
        %s1397 = sor.u32 256, 8
        %1398 = vbcast.lane.b32.xlu0 %v1392, %s1397
        %v1399 = vpop.permute.xlu0 %1398
        %v1400 = vlaneseq
        %v1401 = vshrl.u32 %v1400, 7
        %v1402 = vsub.s32 4, %v1401
        %v1403 = vrot.slane %v874, %v1402
        %1405 = vbcast.lane.b32.xlu0 %v1403, 256
        %v1406 = vpop.permute.xlu0 %1405
        %s1408 = sor.u32 256, 8
        %1409 = vbcast.lane.b32.xlu0 %v1403, %s1408
        %v1410 = vpop.permute.xlu0 %1409
        %v1411 = vlaneseq
        %v1412 = vshrl.u32 %v1411, 7
        %v1413 = vsub.s32 5, %v1412
        %v1414 = vrot.slane %v874, %v1413
        %1416 = vbcast.lane.b32.xlu0 %v1414, 256
        %v1417 = vpop.permute.xlu0 %1416
        %s1419 = sor.u32 256, 8
        %1420 = vbcast.lane.b32.xlu0 %v1414, %s1419
        %v1421 = vpop.permute.xlu0 %1420
        %v1422 = vlaneseq
        %v1423 = vshrl.u32 %v1422, 7
        %v1424 = vsub.s32 6, %v1423
        %v1425 = vrot.slane %v874, %v1424
        %1427 = vbcast.lane.b32.xlu0 %v1425, 256
        %v1428 = vpop.permute.xlu0 %1427
        %s1430 = sor.u32 256, 8
        %1431 = vbcast.lane.b32.xlu0 %v1425, %s1430
        %v1432 = vpop.permute.xlu0 %1431
        %v1433 = vlaneseq
        %v1434 = vshrl.u32 %v1433, 7
        %v1435 = vsub.s32 7, %v1434
        %v1436 = vrot.slane %v874, %v1435
        %1438 = vbcast.lane.b32.xlu0 %v1436, 256
        %v1439 = vpop.permute.xlu0 %1438
        %s1441 = sor.u32 256, 8
        %1442 = vbcast.lane.b32.xlu0 %v1436, %s1441
        %v1443 = vpop.permute.xlu0 %1442
        %v1444 = vlaneseq
        %v1445 = vshrl.u32 %v1444, 7
        %v1446 = vsub.s32 0, %v1445
        %v1447 = vrot.slane %v875, %v1446
        %1449 = vbcast.lane.b32.xlu0 %v1447, 256
        %v1450 = vpop.permute.xlu0 %1449
        %s1452 = sor.u32 256, 8
        %1453 = vbcast.lane.b32.xlu0 %v1447, %s1452
        %v1454 = vpop.permute.xlu0 %1453
        %v1455 = vlaneseq
        %v1456 = vshrl.u32 %v1455, 7
        %v1457 = vsub.s32 1, %v1456
        %v1458 = vrot.slane %v875, %v1457
        %1460 = vbcast.lane.b32.xlu0 %v1458, 256
        %v1461 = vpop.permute.xlu0 %1460
        %s1463 = sor.u32 256, 8
        %1464 = vbcast.lane.b32.xlu0 %v1458, %s1463
        %v1465 = vpop.permute.xlu0 %1464
        %v1466 = vlaneseq
        %v1467 = vshrl.u32 %v1466, 7
        %v1468 = vsub.s32 2, %v1467
        %v1469 = vrot.slane %v875, %v1468
        %1471 = vbcast.lane.b32.xlu0 %v1469, 256
        %v1472 = vpop.permute.xlu0 %1471
        %s1474 = sor.u32 256, 8
        %1475 = vbcast.lane.b32.xlu0 %v1469, %s1474
        %v1476 = vpop.permute.xlu0 %1475
        %v1477 = vlaneseq
        %v1478 = vshrl.u32 %v1477, 7
        %v1479 = vsub.s32 3, %v1478
        %v1480 = vrot.slane %v875, %v1479
        %1482 = vbcast.lane.b32.xlu0 %v1480, 256
        %v1483 = vpop.permute.xlu0 %1482
        %s1485 = sor.u32 256, 8
        %1486 = vbcast.lane.b32.xlu0 %v1480, %s1485
        %v1487 = vpop.permute.xlu0 %1486
        %v1488 = vlaneseq
        %v1489 = vshrl.u32 %v1488, 7
        %v1490 = vsub.s32 4, %v1489
        %v1491 = vrot.slane %v875, %v1490
        %1493 = vbcast.lane.b32.xlu0 %v1491, 256
        %v1494 = vpop.permute.xlu0 %1493
        %s1496 = sor.u32 256, 8
        %1497 = vbcast.lane.b32.xlu0 %v1491, %s1496
        %v1498 = vpop.permute.xlu0 %1497
        %v1499 = vlaneseq
        %v1500 = vshrl.u32 %v1499, 7
        %v1501 = vsub.s32 5, %v1500
        %v1502 = vrot.slane %v875, %v1501
        %1504 = vbcast.lane.b32.xlu0 %v1502, 256
        %v1505 = vpop.permute.xlu0 %1504
        %s1507 = sor.u32 256, 8
        %1508 = vbcast.lane.b32.xlu0 %v1502, %s1507
        %v1509 = vpop.permute.xlu0 %1508
        %v1510 = vlaneseq
        %v1511 = vshrl.u32 %v1510, 7
        %v1512 = vsub.s32 6, %v1511
        %v1513 = vrot.slane %v875, %v1512
        %1515 = vbcast.lane.b32.xlu0 %v1513, 256
        %v1516 = vpop.permute.xlu0 %1515
        %s1518 = sor.u32 256, 8
        %1519 = vbcast.lane.b32.xlu0 %v1513, %s1518
        %v1520 = vpop.permute.xlu0 %1519
        %v1521 = vlaneseq
        %v1522 = vshrl.u32 %v1521, 7
        %v1523 = vsub.s32 7, %v1522
        %v1524 = vrot.slane %v875, %v1523
        %1526 = vbcast.lane.b32.xlu0 %v1524, 256
        %v1527 = vpop.permute.xlu0 %1526
        %s1529 = sor.u32 256, 8
        %1530 = vbcast.lane.b32.xlu0 %v1524, %s1529
        %v1531 = vpop.permute.xlu0 %1530
        %v1532 = vmul.f32 %v1362, %v1324
        %v1533 = vmul.f32 %v1366, %v1325
        %v1534 = vmul.f32 %v1373, %v1326
        %v1535 = vmul.f32 %v1377, %v1327
        %v1536 = vmul.f32 %v1384, %v1328
        %v1537 = vmul.f32 %v1388, %v1329
        %v1538 = vmul.f32 %v1395, %v1330
        %v1539 = vmul.f32 %v1399, %v1331
        %v1540 = vmul.f32 %v1406, %v1332
        %v1541 = vmul.f32 %v1410, %v1333
        %v1542 = vmul.f32 %v1417, %v1334
        %v1543 = vmul.f32 %v1421, %v1335
        %v1544 = vmul.f32 %v1428, %v1336
        %v1545 = vmul.f32 %v1432, %v1337
        %v1546 = vmul.f32 %v1439, %v1338
        %v1547 = vmul.f32 %v1443, %v1339
        %v1548 = vmul.f32 %v1450, %v1340
        %v1549 = vmul.f32 %v1454, %v1341
        %v1550 = vmul.f32 %v1461, %v1342
        %v1551 = vmul.f32 %v1465, %v1343
        %v1552 = vmul.f32 %v1472, %v1344
        %v1553 = vmul.f32 %v1476, %v1345
        %v1554 = vmul.f32 %v1483, %v1346
        %v1555 = vmul.f32 %v1487, %v1347
        %v1556 = vmul.f32 %v1494, %v1348
        %v1557 = vmul.f32 %v1498, %v1349
        %v1558 = vmul.f32 %v1505, %v1350
        %v1559 = vmul.f32 %v1509, %v1351
        %v1560 = vmul.f32 %v1516, %v1352
        %v1561 = vmul.f32 %v1520, %v1353
        %v1562 = vmul.f32 %v1527, %v1354
        %v1563 = vmul.f32 %v1531, %v1355
        %v1564 = vsel %vm921, %v1532, 0.0
        %v1565 = vsel %vm921, %v1534, 0.0
        %v1566 = vadd.f32 %v1564, %v1565
        %v1567 = vsel %vm921, %v1536, 0.0
        %v1568 = vadd.f32 %v1566, %v1567
        %v1569 = vsel %vm921, %v1538, 0.0
        %v1570 = vadd.f32 %v1568, %v1569
        %v1571 = vsel %vm921, %v1540, 0.0
        %v1572 = vadd.f32 %v1570, %v1571
        %v1573 = vsel %vm921, %v1542, 0.0
        %v1574 = vadd.f32 %v1572, %v1573
        %v1575 = vsel %vm921, %v1544, 0.0
        %v1576 = vadd.f32 %v1574, %v1575
        %v1577 = vsel %vm921, %v1546, 0.0
        %v1578 = vadd.f32 %v1576, %v1577
        %v1579 = vsel %vm921, %v1548, 0.0
        %v1580 = vadd.f32 %v1578, %v1579
        %v1581 = vsel %vm921, %v1550, 0.0
        %v1582 = vadd.f32 %v1580, %v1581
        %v1583 = vsel %vm921, %v1552, 0.0
        %v1584 = vadd.f32 %v1582, %v1583
        %v1585 = vsel %vm921, %v1554, 0.0
        %v1586 = vadd.f32 %v1584, %v1585
        %v1587 = vsel %vm921, %v1556, 0.0
        %v1588 = vadd.f32 %v1586, %v1587
        %v1589 = vsel %vm921, %v1558, 0.0
        %v1590 = vadd.f32 %v1588, %v1589
        %v1591 = vsel %vm921, %v1560, 0.0
        %v1592 = vadd.f32 %v1590, %v1591
        %v1593 = vsel %vm921, %v1562, 0.0
        %v1594 = vadd.f32 %v1592, %v1593
        %v1595 = vsel %vm921, %v1533, 0.0
        %v1596 = vsel %vm921, %v1535, 0.0
        %v1597 = vadd.f32 %v1595, %v1596
        %v1598 = vsel %vm921, %v1537, 0.0
        %v1599 = vadd.f32 %v1597, %v1598
        %v1600 = vsel %vm921, %v1539, 0.0
        %v1601 = vadd.f32 %v1599, %v1600
        %v1602 = vsel %vm921, %v1541, 0.0
        %v1603 = vadd.f32 %v1601, %v1602
        %v1604 = vsel %vm921, %v1543, 0.0
        %v1605 = vadd.f32 %v1603, %v1604
        %v1606 = vsel %vm921, %v1545, 0.0
        %v1607 = vadd.f32 %v1605, %v1606
        %v1608 = vsel %vm921, %v1547, 0.0
        %v1609 = vadd.f32 %v1607, %v1608
        %v1610 = vsel %vm921, %v1549, 0.0
        %v1611 = vadd.f32 %v1609, %v1610
        %v1612 = vsel %vm921, %v1551, 0.0
        %v1613 = vadd.f32 %v1611, %v1612
        %v1614 = vsel %vm921, %v1553, 0.0
        %v1615 = vadd.f32 %v1613, %v1614
        %v1616 = vsel %vm921, %v1555, 0.0
        %v1617 = vadd.f32 %v1615, %v1616
        %v1618 = vsel %vm921, %v1557, 0.0
        %v1619 = vadd.f32 %v1617, %v1618
        %v1620 = vsel %vm921, %v1559, 0.0
        %v1621 = vadd.f32 %v1619, %v1620
        %v1622 = vsel %vm921, %v1561, 0.0
        %v1623 = vadd.f32 %v1621, %v1622
        %v1624 = vsel %vm921, %v1563, 0.0
        %v1625 = vadd.f32 %v1623, %v1624
        %v1626 = vld [vmem:[%s6] sm:$0xff]
        %v1627 = vld [vmem:[%s6 + $0x8] sm:$0xff]
        %v1628 = vld [vmem:[%s6 + $0x10] sm:$0xff]
        %v1629 = vld [vmem:[%s6 + $0x18] sm:$0xff]
        %v1630 = vld [vmem:[%s7] sm:$0x1]
        %1632 = vset.pattern.permute.xlu0 0
        %1633 = vperm.xlu0 %1632, %v901
        %v1634 = vpop.permute.xlu0 %1633
        %1637 = vset.pattern.permute.xlu0 0
        %1638 = vperm.xlu0 %1637, %v902
        %v1639 = vpop.permute.xlu0 %1638
        %v1642 = vlaneseq
        %v1643 = vshrl.u32 %v1642, 7
        %v1644 = vsub.s32 0, %v1643
        %v1645 = vrot.slane %v1630, %v1644
        %v1647 = vmul.f32 %v1634, %v1645
        %v1648 = vmul.f32 %v1639, %v1645
        %v1650 = vsel %vm921, %v1594, 0
        %v1653 = vsel %vm921, %v1625, 0
        %1655 = vmatprep.subr.mxu0 0.0
        %1656 = vmatpush1.msra.mxu0 %v1626
        %1657 = vmatprep.subr.mxu0 0.0
        %1658 = vmatpush1.msra.mxu0 %v1627
        %1659 = vmatprep.subr.mxu0 0.0
        %1660 = vmatpush1.msra.mxu0 %v1628
        %1661 = vmatprep.subr.mxu0 0.0
        %1662 = vmatpush1.msra.mxu0 %v1629
        %1663 = vmatprep.subr.mxu0 0.0
        %1664 = vmatpush1.msra.mxu0 0.0
        %1665 = vmatprep.subr.mxu0 0.0
        %1666 = vmatpush1.msra.mxu0 0.0
        %1667 = vmatprep.subr.mxu0 0.0
        %1668 = vmatpush1.msra.mxu0 0.0
        %1669 = vmatprep.subr.mxu0 0.0
        %1670 = vmatpush1.msra.mxu0 0.0
        %1671 = vmatprep.subr.mxu0 0.0
        %1672 = vmatpush1.msra.mxu0 0.0
        %1673 = vmatprep.subr.mxu0 0.0
        %1674 = vmatpush1.msra.mxu0 0.0
        %1675 = vmatprep.subr.mxu0 0.0
        %1676 = vmatpush1.msra.mxu0 0.0
        %1677 = vmatprep.subr.mxu0 0.0
        %1678 = vmatpush1.msra.mxu0 0.0
        %1679 = vmatprep.subr.mxu0 0.0
        %1680 = vmatpush1.msra.mxu0 0.0
        %1681 = vmatprep.subr.mxu0 0.0
        %1682 = vmatpush1.msra.mxu0 0.0
        %1683 = vmatprep.subr.mxu0 0.0
        %1684 = vmatpush1.msra.mxu0 0.0
        %1685 = vmatprep.subr.mxu0 0.0
        %1686 = vmatpush1.msra.mxu0 0.0
        %1687 = vmatprep.subr.mxu0 0.0
        %1688 = vmatpush1.msra.mxu0 0.0
        %1689 = vmatprep.subr.mxu0 0.0
        %1690 = vmatpush1.msra.mxu0 0.0
        %1691 = vmatprep.subr.mxu0 0.0
        %1692 = vmatpush1.msra.mxu0 0.0
        %1693 = vmatprep.subr.mxu0 0.0
        %1694 = vmatpush1.msra.mxu0 0.0
        %1695 = vmatprep.subr.mxu0 0.0
        %1696 = vmatpush1.msra.mxu0 0.0
        %1697 = vmatprep.subr.mxu0 0.0
        %1698 = vmatpush1.msra.mxu0 0.0
        %1699 = vmatprep.subr.mxu0 0.0
        %1700 = vmatpush1.msra.mxu0 0.0
        %1701 = vmatprep.subr.mxu0 0.0
        %1702 = vmatpush1.msra.mxu0 0.0
        %1703 = vmatprep.subr.mxu0 0.0
        %1704 = vmatpush1.msra.mxu0 0.0
        %1705 = vmatprep.subr.mxu0 0.0
        %1706 = vmatpush1.msra.mxu0 0.0
        %1707 = vmatprep.subr.mxu0 0.0
        %1708 = vmatpush1.msra.mxu0 0.0
        %1709 = vmatprep.subr.mxu0 0.0
        %1710 = vmatpush1.msra.mxu0 0.0
        %1711 = vmatprep.subr.mxu0 0.0
        %1712 = vmatpush1.msra.mxu0 0.0
        %1713 = vmatprep.subr.mxu0 0.0
        %1714 = vmatpush1.msra.mxu0 0.0
        %1715 = vmatprep.subr.mxu0 0.0
        %1716 = vmatpush1.msra.mxu0 0.0
        %1717 = vmatprep.subr.mxu0 0.0
        %1718 = vmatpush1.msra.mxu0 0.0
        %1719 = vmatprep.mubr.f32.mxu0 0.0
        %1720 = vmatmul.mubr.f32.gmra.mrb[0].mxu0 %v1650
        %v1721 = vpop.f32.mrb[0].mxu0
        %v1722 = vadd.f32 %v1647, %v1721
        %v1723 = vpop.f32.mrb[0].mxu0
        %1724 = vmatprep.mubr.f32.mxu0 0.0
        %1725 = vmatmul.mubr.f32.gmra.mrb[0].mxu0 %v1653
        %v1726 = vpop.f32.mrb[0].mxu0
        %v1727 = vadd.f32 %v1648, %v1726
        %v1728 = vpop.f32.mrb[0].mxu0
        %1729 = vdwg.mxu0
        %s1730 = scalar_lea.vmem %s4, 32
        %v1731 = vld [vmem:[%s1730] sm:$0xff]
        %v1732 = vld [vmem:[%s1730 + $0x8] sm:$0xff]
        %v1733 = vld [vmem:[%s1730 + $0x10] sm:$0xff]
        %v1734 = vld [vmem:[%s1730 + $0x18] sm:$0xff]
        %v1736 = vsel %vm921, %v1722, 0
        %v1739 = vsel %vm921, %v1727, 0
        %1741 = vmatprep.subr.mxu0 0.0
        %1742 = vmatpush1.msra.mxu0 %v1731
        %1743 = vmatprep.subr.mxu0 0.0
        %1744 = vmatpush1.msra.mxu0 %v1732
        %1745 = vmatprep.subr.mxu0 0.0
        %1746 = vmatpush1.msra.mxu0 %v1733
        %1747 = vmatprep.subr.mxu0 0.0
        %1748 = vmatpush1.msra.mxu0 %v1734
        %1749 = vmatprep.subr.mxu0 0.0
        %1750 = vmatpush1.msra.mxu0 0.0
        %1751 = vmatprep.subr.mxu0 0.0
        %1752 = vmatpush1.msra.mxu0 0.0
        %1753 = vmatprep.subr.mxu0 0.0
        %1754 = vmatpush1.msra.mxu0 0.0
        %1755 = vmatprep.subr.mxu0 0.0
        %1756 = vmatpush1.msra.mxu0 0.0
        %1757 = vmatprep.subr.mxu0 0.0
        %1758 = vmatpush1.msra.mxu0 0.0
        %1759 = vmatprep.subr.mxu0 0.0
        %1760 = vmatpush1.msra.mxu0 0.0
        %1761 = vmatprep.subr.mxu0 0.0
        %1762 = vmatpush1.msra.mxu0 0.0
        %1763 = vmatprep.subr.mxu0 0.0
        %1764 = vmatpush1.msra.mxu0 0.0
        %1765 = vmatprep.subr.mxu0 0.0
        %1766 = vmatpush1.msra.mxu0 0.0
        %1767 = vmatprep.subr.mxu0 0.0
        %1768 = vmatpush1.msra.mxu0 0.0
        %1769 = vmatprep.subr.mxu0 0.0
        %1770 = vmatpush1.msra.mxu0 0.0
        %1771 = vmatprep.subr.mxu0 0.0
        %1772 = vmatpush1.msra.mxu0 0.0
        %1773 = vmatprep.subr.mxu0 0.0
        %1774 = vmatpush1.msra.mxu0 0.0
        %1775 = vmatprep.subr.mxu0 0.0
        %1776 = vmatpush1.msra.mxu0 0.0
        %1777 = vmatprep.subr.mxu0 0.0
        %1778 = vmatpush1.msra.mxu0 0.0
        %1779 = vmatprep.subr.mxu0 0.0
        %1780 = vmatpush1.msra.mxu0 0.0
        %1781 = vmatprep.subr.mxu0 0.0
        %1782 = vmatpush1.msra.mxu0 0.0
        %1783 = vmatprep.subr.mxu0 0.0
        %1784 = vmatpush1.msra.mxu0 0.0
        %1785 = vmatprep.subr.mxu0 0.0
        %1786 = vmatpush1.msra.mxu0 0.0
        %1787 = vmatprep.subr.mxu0 0.0
        %1788 = vmatpush1.msra.mxu0 0.0
        %1789 = vmatprep.subr.mxu0 0.0
        %1790 = vmatpush1.msra.mxu0 0.0
        %1791 = vmatprep.subr.mxu0 0.0
        %1792 = vmatpush1.msra.mxu0 0.0
        %1793 = vmatprep.subr.mxu0 0.0
        %1794 = vmatpush1.msra.mxu0 0.0
        %1795 = vmatprep.subr.mxu0 0.0
        %1796 = vmatpush1.msra.mxu0 0.0
        %1797 = vmatprep.subr.mxu0 0.0
        %1798 = vmatpush1.msra.mxu0 0.0
        %1799 = vmatprep.subr.mxu0 0.0
        %1800 = vmatpush1.msra.mxu0 0.0
        %1801 = vmatprep.subr.mxu0 0.0
        %1802 = vmatpush1.msra.mxu0 0.0
        %1803 = vmatprep.subr.mxu0 0.0
        %1804 = vmatpush1.msra.mxu0 0.0
        %1805 = vmatprep.mubr.f32.mxu0 0.0
        %1806 = vmatmul.mubr.f32.gmra.mrb[0].mxu0 %v1736
        %v1807 = vpop.f32.mrb[0].mxu0
        %v1808 = vadd.f32 0.0, %v1807
        %v1809 = vpop.f32.mrb[0].mxu0
        %1810 = vmatprep.mubr.f32.mxu0 0.0
        %1811 = vmatmul.mubr.f32.gmra.mrb[0].mxu0 %v1739
        %v1812 = vpop.f32.mrb[0].mxu0
        %v1813 = vadd.f32 0.0, %v1812
        %v1814 = vpop.f32.mrb[0].mxu0
        %1815 = vdwg.mxu0
        %v1818 = vcombine.high %v1808, %v1808
        %v1820 = vunpack.c.l.s4 1966171168
        %v1821 = vunpack.c.0.s8 %v1820
        %v1822 = vlaneseq
        %v1823 = vshrl.u32 %v1822, 7
        %v1824 = vsub.s32 %v1821, %v1823
        %v1825 = vrot.slane %v1808, %v1824
        %v1827 = vunpack.c.l.s4 1966171168
        %v1828 = vunpack.c.0.s8 %v1827
        %v1829 = vlaneseq
        %v1830 = vshrl.u32 %v1829, 7
        %v1831 = vsub.s32 %v1828, %v1830
        %v1832 = vrot.slane %v1818, %v1831
        %v1833 = vcombine.high %v1825, %v1825
        %v1834 = vcombine.high %v1832, %v1832
        %v1836 = vunpack.c.l.s4 1966171168
        %v1837 = vunpack.c.0.s8 %v1836
        %v1838 = vlaneseq
        %v1839 = vshrl.u32 %v1838, 7
        %v1840 = vsub.s32 %v1837, %v1839
        %v1841 = vrot.slane %v1825, %v1840
        %v1843 = vunpack.c.l.s4 1966171168
        %v1844 = vunpack.c.0.s8 %v1843
        %v1845 = vlaneseq
        %v1846 = vshrl.u32 %v1845, 7
        %v1847 = vsub.s32 %v1844, %v1846
        %v1848 = vrot.slane %v1832, %v1847
        %v1850 = vunpack.c.l.s4 1966171168
        %v1851 = vunpack.c.0.s8 %v1850
        %v1852 = vlaneseq
        %v1853 = vshrl.u32 %v1852, 7
        %v1854 = vsub.s32 %v1851, %v1853
        %v1855 = vrot.slane %v1833, %v1854
        %v1857 = vunpack.c.l.s4 1966171168
        %v1858 = vunpack.c.0.s8 %v1857
        %v1859 = vlaneseq
        %v1860 = vshrl.u32 %v1859, 7
        %v1861 = vsub.s32 %v1858, %v1860
        %v1862 = vrot.slane %v1834, %v1861
        %v1863 = vcombine.high %v1841, %v1841
        %v1864 = vcombine.high %v1848, %v1848
        %v1865 = vcombine.high %v1855, %v1855
        %v1866 = vcombine.high %v1862, %v1862
        %v1867 = vcombine.high %v1813, %v1813
        %v1869 = vunpack.c.l.s4 1966171168
        %v1870 = vunpack.c.0.s8 %v1869
        %v1871 = vlaneseq
        %v1872 = vshrl.u32 %v1871, 7
        %v1873 = vsub.s32 %v1870, %v1872
        %v1874 = vrot.slane %v1813, %v1873
        %v1876 = vunpack.c.l.s4 1966171168
        %v1877 = vunpack.c.0.s8 %v1876
        %v1878 = vlaneseq
        %v1879 = vshrl.u32 %v1878, 7
        %v1880 = vsub.s32 %v1877, %v1879
        %v1881 = vrot.slane %v1867, %v1880
        %v1882 = vcombine.high %v1874, %v1874
        %v1883 = vcombine.high %v1881, %v1881
        %v1885 = vunpack.c.l.s4 1966171168
        %v1886 = vunpack.c.0.s8 %v1885
        %v1887 = vlaneseq
        %v1888 = vshrl.u32 %v1887, 7
        %v1889 = vsub.s32 %v1886, %v1888
        %v1890 = vrot.slane %v1874, %v1889
        %v1892 = vunpack.c.l.s4 1966171168
        %v1893 = vunpack.c.0.s8 %v1892
        %v1894 = vlaneseq
        %v1895 = vshrl.u32 %v1894, 7
        %v1896 = vsub.s32 %v1893, %v1895
        %v1897 = vrot.slane %v1881, %v1896
        %v1899 = vunpack.c.l.s4 1966171168
        %v1900 = vunpack.c.0.s8 %v1899
        %v1901 = vlaneseq
        %v1902 = vshrl.u32 %v1901, 7
        %v1903 = vsub.s32 %v1900, %v1902
        %v1904 = vrot.slane %v1882, %v1903
        %v1906 = vunpack.c.l.s4 1966171168
        %v1907 = vunpack.c.0.s8 %v1906
        %v1908 = vlaneseq
        %v1909 = vshrl.u32 %v1908, 7
        %v1910 = vsub.s32 %v1907, %v1909
        %v1911 = vrot.slane %v1883, %v1910
        %v1912 = vcombine.high %v1890, %v1890
        %v1913 = vcombine.high %v1897, %v1897
        %v1914 = vcombine.high %v1904, %v1904
        %v1915 = vcombine.high %v1911, %v1911
        %v1916 = vlaneseq
        %v1917 = vshrl.u32 %v1916, 7
        %v1918 = vsub.s32 0, %v1917
        %v1919 = vrot.slane %v1841, %v1918
        %v1920 = vlaneseq
        %v1921 = vshrl.u32 %v1920, 7
        %v1922 = vsub.s32 0, %v1921
        %v1923 = vrot.slane %v1855, %v1922
        %v1924 = vlaneseq
        %v1925 = vshrl.u32 %v1924, 7
        %v1926 = vsub.s32 0, %v1925
        %v1927 = vrot.slane %v1863, %v1926
        %v1928 = vlaneseq
        %v1929 = vshrl.u32 %v1928, 7
        %v1930 = vsub.s32 0, %v1929
        %v1931 = vrot.slane %v1865, %v1930
        %v1932 = vlaneseq
        %v1933 = vshrl.u32 %v1932, 7
        %v1934 = vsub.s32 0, %v1933
        %v1935 = vrot.slane %v1848, %v1934
        %v1936 = vlaneseq
        %v1937 = vshrl.u32 %v1936, 7
        %v1938 = vsub.s32 0, %v1937
        %v1939 = vrot.slane %v1862, %v1938
        %v1940 = vlaneseq
        %v1941 = vshrl.u32 %v1940, 7
        %v1942 = vsub.s32 0, %v1941
        %v1943 = vrot.slane %v1864, %v1942
        %v1944 = vlaneseq
        %v1945 = vshrl.u32 %v1944, 7
        %v1946 = vsub.s32 0, %v1945
        %v1947 = vrot.slane %v1866, %v1946
        %v1948 = vlaneseq
        %v1949 = vshrl.u32 %v1948, 7
        %v1950 = vsub.s32 0, %v1949
        %v1951 = vrot.slane %v1890, %v1950
        %v1952 = vlaneseq
        %v1953 = vshrl.u32 %v1952, 7
        %v1954 = vsub.s32 0, %v1953
        %v1955 = vrot.slane %v1904, %v1954
        %v1956 = vlaneseq
        %v1957 = vshrl.u32 %v1956, 7
        %v1958 = vsub.s32 0, %v1957
        %v1959 = vrot.slane %v1912, %v1958
        %v1960 = vlaneseq
        %v1961 = vshrl.u32 %v1960, 7
        %v1962 = vsub.s32 0, %v1961
        %v1963 = vrot.slane %v1914, %v1962
        %v1964 = vlaneseq
        %v1965 = vshrl.u32 %v1964, 7
        %v1966 = vsub.s32 0, %v1965
        %v1967 = vrot.slane %v1897, %v1966
        %v1968 = vlaneseq
        %v1969 = vshrl.u32 %v1968, 7
        %v1970 = vsub.s32 0, %v1969
        %v1971 = vrot.slane %v1911, %v1970
        %v1972 = vlaneseq
        %v1973 = vshrl.u32 %v1972, 7
        %v1974 = vsub.s32 0, %v1973
        %v1975 = vrot.slane %v1913, %v1974
        %v1976 = vlaneseq
        %v1977 = vshrl.u32 %v1976, 7
        %v1978 = vsub.s32 0, %v1977
        %v1979 = vrot.slane %v1915, %v1978
        %1980 = vrot.lane.b32.xlu0 %v1919, 96
        %v1981 = vpop.permute.xlu0 %1980
        %1982 = vrot.lane.b32.xlu0 %v1923, 96
        %v1983 = vpop.permute.xlu0 %1982
        %1984 = vrot.lane.b32.xlu0 %v1927, 96
        %v1985 = vpop.permute.xlu0 %1984
        %1986 = vrot.lane.b32.xlu0 %v1931, 96
        %v1987 = vpop.permute.xlu0 %1986
        %1988 = vrot.lane.b32.xlu0 %v1935, 96
        %v1989 = vpop.permute.xlu0 %1988
        %1990 = vrot.lane.b32.xlu0 %v1939, 96
        %v1991 = vpop.permute.xlu0 %1990
        %1992 = vrot.lane.b32.xlu0 %v1943, 96
        %v1993 = vpop.permute.xlu0 %1992
        %1994 = vrot.lane.b32.xlu0 %v1947, 96
        %v1995 = vpop.permute.xlu0 %1994
        %1996 = vrot.lane.b32.xlu0 %v1951, 96
        %v1997 = vpop.permute.xlu0 %1996
        %1998 = vrot.lane.b32.xlu0 %v1955, 96
        %v1999 = vpop.permute.xlu0 %1998
        %2000 = vrot.lane.b32.xlu0 %v1959, 96
        %v2001 = vpop.permute.xlu0 %2000
        %2002 = vrot.lane.b32.xlu0 %v1963, 96
        %v2003 = vpop.permute.xlu0 %2002
        %2004 = vrot.lane.b32.xlu0 %v1967, 96
        %v2005 = vpop.permute.xlu0 %2004
        %2006 = vrot.lane.b32.xlu0 %v1971, 96
        %v2007 = vpop.permute.xlu0 %2006
        %2008 = vrot.lane.b32.xlu0 %v1975, 96
        %v2009 = vpop.permute.xlu0 %2008
        %2010 = vrot.lane.b32.xlu0 %v1979, 96
        %v2011 = vpop.permute.xlu0 %2010
        %v2028 = vadd.f32 %v1808, %v1981
        %v2029 = vadd.f32 %v1813, %v1981
        %v2030 = vadd.f32 %v1808, %v1983
        %v2031 = vadd.f32 %v1813, %v1983
        %v2032 = vadd.f32 %v1808, %v1985
        %v2033 = vadd.f32 %v1813, %v1985
        %v2034 = vadd.f32 %v1808, %v1987
        %v2035 = vadd.f32 %v1813, %v1987
        %v2036 = vadd.f32 %v1808, %v1989
        %v2037 = vadd.f32 %v1813, %v1989
        %v2038 = vadd.f32 %v1808, %v1991
        %v2039 = vadd.f32 %v1813, %v1991
        %v2040 = vadd.f32 %v1808, %v1993
        %v2041 = vadd.f32 %v1813, %v1993
        %v2042 = vadd.f32 %v1808, %v1995
        %v2043 = vadd.f32 %v1813, %v1995
        %v2044 = vadd.f32 %v1808, %v1997
        %v2045 = vadd.f32 %v1813, %v1997
        %v2046 = vadd.f32 %v1808, %v1999
        %v2047 = vadd.f32 %v1813, %v1999
        %v2048 = vadd.f32 %v1808, %v2001
        %v2049 = vadd.f32 %v1813, %v2001
        %v2050 = vadd.f32 %v1808, %v2003
        %v2051 = vadd.f32 %v1813, %v2003
        %v2052 = vadd.f32 %v1808, %v2005
        %v2053 = vadd.f32 %v1813, %v2005
        %v2054 = vadd.f32 %v1808, %v2007
        %v2055 = vadd.f32 %v1813, %v2007
        %v2056 = vadd.f32 %v1808, %v2009
        %v2057 = vadd.f32 %v1813, %v2009
        %v2058 = vadd.f32 %v1808, %v2011
        %v2059 = vadd.f32 %v1813, %v2011
        %2060 = vrot.lane.b32.xlu0 %v1808, 96
        %v2061 = vpop.permute.xlu0 %2060
        %2062 = vrot.lane.b32.xlu0 %v1813, 96
        %v2063 = vpop.permute.xlu0 %2062
        %v2066 = vsub.f32 %v2028, %v2061
        %v2067 = vsub.f32 %v2029, %v2063
        %v2068 = vsub.f32 %v2030, %v2061
        %v2069 = vsub.f32 %v2031, %v2063
        %v2070 = vsub.f32 %v2032, %v2061
        %v2071 = vsub.f32 %v2033, %v2063
        %v2072 = vsub.f32 %v2034, %v2061
        %v2073 = vsub.f32 %v2035, %v2063
        %v2074 = vsub.f32 %v2036, %v2061
        %v2075 = vsub.f32 %v2037, %v2063
        %v2076 = vsub.f32 %v2038, %v2061
        %v2077 = vsub.f32 %v2039, %v2063
        %v2078 = vsub.f32 %v2040, %v2061
        %v2079 = vsub.f32 %v2041, %v2063
        %v2080 = vsub.f32 %v2042, %v2061
        %v2081 = vsub.f32 %v2043, %v2063
        %v2082 = vsub.f32 %v2044, %v2061
        %v2083 = vsub.f32 %v2045, %v2063
        %v2084 = vsub.f32 %v2046, %v2061
        %v2085 = vsub.f32 %v2047, %v2063
        %v2086 = vsub.f32 %v2048, %v2061
        %v2087 = vsub.f32 %v2049, %v2063
        %v2088 = vsub.f32 %v2050, %v2061
        %v2089 = vsub.f32 %v2051, %v2063
        %v2090 = vsub.f32 %v2052, %v2061
        %v2091 = vsub.f32 %v2053, %v2063
        %v2092 = vsub.f32 %v2054, %v2061
        %v2093 = vsub.f32 %v2055, %v2063
        %v2094 = vsub.f32 %v2056, %v2061
        %v2095 = vsub.f32 %v2057, %v2063
        %v2096 = vsub.f32 %v2058, %v2061
        %v2097 = vsub.f32 %v2059, %v2063
        %s2098 = scalar_lea.vmem %s5, 1
        %v2099 = vld [vmem:[%s2098] sm:$0x1]
        %v2101 = vlaneseq
        %v2102 = vshrl.u32 %v2101, 7
        %v2103 = vsub.s32 0, %v2102
        %v2104 = vrot.slane %v2099, %v2103
        %v2106 = vadd.f32 %v2066, %v2104
        %v2107 = vadd.f32 %v2067, %v2104
        %v2108 = vadd.f32 %v2068, %v2104
        %v2109 = vadd.f32 %v2069, %v2104
        %v2110 = vadd.f32 %v2070, %v2104
        %v2111 = vadd.f32 %v2071, %v2104
        %v2112 = vadd.f32 %v2072, %v2104
        %v2113 = vadd.f32 %v2073, %v2104
        %v2114 = vadd.f32 %v2074, %v2104
        %v2115 = vadd.f32 %v2075, %v2104
        %v2116 = vadd.f32 %v2076, %v2104
        %v2117 = vadd.f32 %v2077, %v2104
        %v2118 = vadd.f32 %v2078, %v2104
        %v2119 = vadd.f32 %v2079, %v2104
        %v2120 = vadd.f32 %v2080, %v2104
        %v2121 = vadd.f32 %v2081, %v2104
        %v2122 = vadd.f32 %v2082, %v2104
        %v2123 = vadd.f32 %v2083, %v2104
        %v2124 = vadd.f32 %v2084, %v2104
        %v2125 = vadd.f32 %v2085, %v2104
        %v2126 = vadd.f32 %v2086, %v2104
        %v2127 = vadd.f32 %v2087, %v2104
        %v2128 = vadd.f32 %v2088, %v2104
        %v2129 = vadd.f32 %v2089, %v2104
        %v2130 = vadd.f32 %v2090, %v2104
        %v2131 = vadd.f32 %v2091, %v2104
        %v2132 = vadd.f32 %v2092, %v2104
        %v2133 = vadd.f32 %v2093, %v2104
        %v2134 = vadd.f32 %v2094, %v2104
        %v2135 = vadd.f32 %v2095, %v2104
        %v2136 = vadd.f32 %v2096, %v2104
        %v2137 = vadd.f32 %v2097, %v2104
        %v2138 = vmax.f32 %v2106, 0.0
        %v2139 = vmax.f32 %v2107, 0.0
        %v2140 = vmax.f32 %v2108, 0.0
        %v2141 = vmax.f32 %v2109, 0.0
        %v2142 = vmax.f32 %v2110, 0.0
        %v2143 = vmax.f32 %v2111, 0.0
        %v2144 = vmax.f32 %v2112, 0.0
        %v2145 = vmax.f32 %v2113, 0.0
        %v2146 = vmax.f32 %v2114, 0.0
        %v2147 = vmax.f32 %v2115, 0.0
        %v2148 = vmax.f32 %v2116, 0.0
        %v2149 = vmax.f32 %v2117, 0.0
        %v2150 = vmax.f32 %v2118, 0.0
        %v2151 = vmax.f32 %v2119, 0.0
        %v2152 = vmax.f32 %v2120, 0.0
        %v2153 = vmax.f32 %v2121, 0.0
        %v2154 = vmax.f32 %v2122, 0.0
        %v2155 = vmax.f32 %v2123, 0.0
        %v2156 = vmax.f32 %v2124, 0.0
        %v2157 = vmax.f32 %v2125, 0.0
        %v2158 = vmax.f32 %v2126, 0.0
        %v2159 = vmax.f32 %v2127, 0.0
        %v2160 = vmax.f32 %v2128, 0.0
        %v2161 = vmax.f32 %v2129, 0.0
        %v2162 = vmax.f32 %v2130, 0.0
        %v2163 = vmax.f32 %v2131, 0.0
        %v2164 = vmax.f32 %v2132, 0.0
        %v2165 = vmax.f32 %v2133, 0.0
        %v2166 = vmax.f32 %v2134, 0.0
        %v2167 = vmax.f32 %v2135, 0.0
        %v2168 = vmax.f32 %v2136, 0.0
        %v2169 = vmax.f32 %v2137, 0.0
        %v2170 = vmul.f32 %v1362, %v2138
        %v2171 = vmul.f32 %v1366, %v2139
        %v2172 = vmul.f32 %v1373, %v2140
        %v2173 = vmul.f32 %v1377, %v2141
        %v2174 = vmul.f32 %v1384, %v2142
        %v2175 = vmul.f32 %v1388, %v2143
        %v2176 = vmul.f32 %v1395, %v2144
        %v2177 = vmul.f32 %v1399, %v2145
        %v2178 = vmul.f32 %v1406, %v2146
        %v2179 = vmul.f32 %v1410, %v2147
        %v2180 = vmul.f32 %v1417, %v2148
        %v2181 = vmul.f32 %v1421, %v2149
        %v2182 = vmul.f32 %v1428, %v2150
        %v2183 = vmul.f32 %v1432, %v2151
        %v2184 = vmul.f32 %v1439, %v2152
        %v2185 = vmul.f32 %v1443, %v2153
        %v2186 = vmul.f32 %v1450, %v2154
        %v2187 = vmul.f32 %v1454, %v2155
        %v2188 = vmul.f32 %v1461, %v2156
        %v2189 = vmul.f32 %v1465, %v2157
        %v2190 = vmul.f32 %v1472, %v2158
        %v2191 = vmul.f32 %v1476, %v2159
        %v2192 = vmul.f32 %v1483, %v2160
        %v2193 = vmul.f32 %v1487, %v2161
        %v2194 = vmul.f32 %v1494, %v2162
        %v2195 = vmul.f32 %v1498, %v2163
        %v2196 = vmul.f32 %v1505, %v2164
        %v2197 = vmul.f32 %v1509, %v2165
        %v2198 = vmul.f32 %v1516, %v2166
        %v2199 = vmul.f32 %v1520, %v2167
        %v2200 = vmul.f32 %v1527, %v2168
        %v2201 = vmul.f32 %v1531, %v2169
        %v2202 = vsel %vm921, %v2170, 0.0
        %v2203 = vsel %vm921, %v2172, 0.0
        %v2204 = vadd.f32 %v2202, %v2203
        %v2205 = vsel %vm921, %v2174, 0.0
        %v2206 = vadd.f32 %v2204, %v2205
        %v2207 = vsel %vm921, %v2176, 0.0
        %v2208 = vadd.f32 %v2206, %v2207
        %v2209 = vsel %vm921, %v2178, 0.0
        %v2210 = vadd.f32 %v2208, %v2209
        %v2211 = vsel %vm921, %v2180, 0.0
        %v2212 = vadd.f32 %v2210, %v2211
        %v2213 = vsel %vm921, %v2182, 0.0
        %v2214 = vadd.f32 %v2212, %v2213
        %v2215 = vsel %vm921, %v2184, 0.0
        %v2216 = vadd.f32 %v2214, %v2215
        %v2217 = vsel %vm921, %v2186, 0.0
        %v2218 = vadd.f32 %v2216, %v2217
        %v2219 = vsel %vm921, %v2188, 0.0
        %v2220 = vadd.f32 %v2218, %v2219
        %v2221 = vsel %vm921, %v2190, 0.0
        %v2222 = vadd.f32 %v2220, %v2221
        %v2223 = vsel %vm921, %v2192, 0.0
        %v2224 = vadd.f32 %v2222, %v2223
        %v2225 = vsel %vm921, %v2194, 0.0
        %v2226 = vadd.f32 %v2224, %v2225
        %v2227 = vsel %vm921, %v2196, 0.0
        %v2228 = vadd.f32 %v2226, %v2227
        %v2229 = vsel %vm921, %v2198, 0.0
        %v2230 = vadd.f32 %v2228, %v2229
        %v2231 = vsel %vm921, %v2200, 0.0
        %v2232 = vadd.f32 %v2230, %v2231
        %v2233 = vsel %vm921, %v2171, 0.0
        %v2234 = vsel %vm921, %v2173, 0.0
        %v2235 = vadd.f32 %v2233, %v2234
        %v2236 = vsel %vm921, %v2175, 0.0
        %v2237 = vadd.f32 %v2235, %v2236
        %v2238 = vsel %vm921, %v2177, 0.0
        %v2239 = vadd.f32 %v2237, %v2238
        %v2240 = vsel %vm921, %v2179, 0.0
        %v2241 = vadd.f32 %v2239, %v2240
        %v2242 = vsel %vm921, %v2181, 0.0
        %v2243 = vadd.f32 %v2241, %v2242
        %v2244 = vsel %vm921, %v2183, 0.0
        %v2245 = vadd.f32 %v2243, %v2244
        %v2246 = vsel %vm921, %v2185, 0.0
        %v2247 = vadd.f32 %v2245, %v2246
        %v2248 = vsel %vm921, %v2187, 0.0
        %v2249 = vadd.f32 %v2247, %v2248
        %v2250 = vsel %vm921, %v2189, 0.0
        %v2251 = vadd.f32 %v2249, %v2250
        %v2252 = vsel %vm921, %v2191, 0.0
        %v2253 = vadd.f32 %v2251, %v2252
        %v2254 = vsel %vm921, %v2193, 0.0
        %v2255 = vadd.f32 %v2253, %v2254
        %v2256 = vsel %vm921, %v2195, 0.0
        %v2257 = vadd.f32 %v2255, %v2256
        %v2258 = vsel %vm921, %v2197, 0.0
        %v2259 = vadd.f32 %v2257, %v2258
        %v2260 = vsel %vm921, %v2199, 0.0
        %v2261 = vadd.f32 %v2259, %v2260
        %v2262 = vsel %vm921, %v2201, 0.0
        %v2263 = vadd.f32 %v2261, %v2262
        %s2264 = scalar_lea.vmem %s6, 32
        %v2265 = vld [vmem:[%s2264] sm:$0xff]
        %v2266 = vld [vmem:[%s2264 + $0x8] sm:$0xff]
        %v2267 = vld [vmem:[%s2264 + $0x10] sm:$0xff]
        %v2268 = vld [vmem:[%s2264 + $0x18] sm:$0xff]
        %s2269 = scalar_lea.vmem %s7, 1
        %v2270 = vld [vmem:[%s2269] sm:$0x1]
        %v2272 = vlaneseq
        %v2273 = vshrl.u32 %v2272, 7
        %v2274 = vsub.s32 0, %v2273
        %v2275 = vrot.slane %v2270, %v2274
        %v2277 = vmul.f32 %v1634, %v2275
        %v2278 = vmul.f32 %v1639, %v2275
        %v2280 = vsel %vm921, %v2232, 0
        %v2283 = vsel %vm921, %v2263, 0
        %2285 = vmatprep.subr.mxu0 0.0
        %2286 = vmatpush1.msra.mxu0 %v2265
        %2287 = vmatprep.subr.mxu0 0.0
        %2288 = vmatpush1.msra.mxu0 %v2266
        %2289 = vmatprep.subr.mxu0 0.0
        %2290 = vmatpush1.msra.mxu0 %v2267
        %2291 = vmatprep.subr.mxu0 0.0
        %2292 = vmatpush1.msra.mxu0 %v2268
        %2293 = vmatprep.subr.mxu0 0.0
        %2294 = vmatpush1.msra.mxu0 0.0
        %2295 = vmatprep.subr.mxu0 0.0
        %2296 = vmatpush1.msra.mxu0 0.0
        %2297 = vmatprep.subr.mxu0 0.0
        %2298 = vmatpush1.msra.mxu0 0.0
        %2299 = vmatprep.subr.mxu0 0.0
        %2300 = vmatpush1.msra.mxu0 0.0
        %2301 = vmatprep.subr.mxu0 0.0
        %2302 = vmatpush1.msra.mxu0 0.0
        %2303 = vmatprep.subr.mxu0 0.0
        %2304 = vmatpush1.msra.mxu0 0.0
        %2305 = vmatprep.subr.mxu0 0.0
        %2306 = vmatpush1.msra.mxu0 0.0
        %2307 = vmatprep.subr.mxu0 0.0
        %2308 = vmatpush1.msra.mxu0 0.0
        %2309 = vmatprep.subr.mxu0 0.0
        %2310 = vmatpush1.msra.mxu0 0.0
        %2311 = vmatprep.subr.mxu0 0.0
        %2312 = vmatpush1.msra.mxu0 0.0
        %2313 = vmatprep.subr.mxu0 0.0
        %2314 = vmatpush1.msra.mxu0 0.0
        %2315 = vmatprep.subr.mxu0 0.0
        %2316 = vmatpush1.msra.mxu0 0.0
        %2317 = vmatprep.subr.mxu0 0.0
        %2318 = vmatpush1.msra.mxu0 0.0
        %2319 = vmatprep.subr.mxu0 0.0
        %2320 = vmatpush1.msra.mxu0 0.0
        %2321 = vmatprep.subr.mxu0 0.0
        %2322 = vmatpush1.msra.mxu0 0.0
        %2323 = vmatprep.subr.mxu0 0.0
        %2324 = vmatpush1.msra.mxu0 0.0
        %2325 = vmatprep.subr.mxu0 0.0
        %2326 = vmatpush1.msra.mxu0 0.0
        %2327 = vmatprep.subr.mxu0 0.0
        %2328 = vmatpush1.msra.mxu0 0.0
        %2329 = vmatprep.subr.mxu0 0.0
        %2330 = vmatpush1.msra.mxu0 0.0
        %2331 = vmatprep.subr.mxu0 0.0
        %2332 = vmatpush1.msra.mxu0 0.0
        %2333 = vmatprep.subr.mxu0 0.0
        %2334 = vmatpush1.msra.mxu0 0.0
        %2335 = vmatprep.subr.mxu0 0.0
        %2336 = vmatpush1.msra.mxu0 0.0
        %2337 = vmatprep.subr.mxu0 0.0
        %2338 = vmatpush1.msra.mxu0 0.0
        %2339 = vmatprep.subr.mxu0 0.0
        %2340 = vmatpush1.msra.mxu0 0.0
        %2341 = vmatprep.subr.mxu0 0.0
        %2342 = vmatpush1.msra.mxu0 0.0
        %2343 = vmatprep.subr.mxu0 0.0
        %2344 = vmatpush1.msra.mxu0 0.0
        %2345 = vmatprep.subr.mxu0 0.0
        %2346 = vmatpush1.msra.mxu0 0.0
        %2347 = vmatprep.subr.mxu0 0.0
        %2348 = vmatpush1.msra.mxu0 0.0
        %2349 = vmatprep.mubr.f32.mxu0 0.0
        %2350 = vmatmul.mubr.f32.gmra.mrb[0].mxu0 %v2280
        %v2351 = vpop.f32.mrb[0].mxu0
        %v2352 = vadd.f32 %v2277, %v2351
        %v2353 = vpop.f32.mrb[0].mxu0
        %2354 = vmatprep.mubr.f32.mxu0 0.0
        %2355 = vmatmul.mubr.f32.gmra.mrb[0].mxu0 %v2283
        %v2356 = vpop.f32.mrb[0].mxu0
        %v2357 = vadd.f32 %v2278, %v2356
        %v2358 = vpop.f32.mrb[0].mxu0
        %2359 = vdwg.mxu0
        %v2360 = vadd.f32 %v822, %v2352
        %v2361 = vadd.f32 %v823, %v2357
        %v2362 = vmul.f32 %v859, %v2360
        %v2363 = vmul.f32 %v864, %v2361
        %2364 = vst.msk [vmem:[%s375] sm:$0xff] %vm921, %v2362
        %2365 = vst.msk [vmem:[%s375 + $0x8] sm:$0xff] %vm921, %v2363
        %s2366 = sand.u32 %s223, 1
        %s2367 = scalar_lea.sflag [#allocation3], %s2366
        %s2368 = sand.u32 %s223, 1
        %s2369 = smul.addr %s2368, 16
        %s2370 = scalar_lea.vmem [#allocation2], %s2369
        %s2371 = sand.u32 %s249, 1
        %s2372 = scalar_lea.sflag [#allocation5], %s2371
        %s2373 = sand.u32 %s249, 1
        %s2374 = smul.addr %s2373, 16
        %s2375 = scalar_lea.vmem [#allocation4], %s2374
        // Predicated region
        $region53: #{tpu_custom_call.1} parent=51 // pred_check
          %p2376 = pneg %p233
        $region54: #{tpu_custom_call.1} parent=51 // pred_check_branch
          %2378 = sbr.rel (%p2376) target = $region56
        $region55: #{tpu_custom_call.1} parent=51 // pred_region
          %s2380 = ssub.s32 256, 256
          %2381 = vsyncadd %s2367, %s2380
          %s2382 = smul.addr %s27, 2
          %s2383 = smul.addr %s2382, 128
          %s2384 = scalar_lea.hbm %s8, %s2383
          %s2385 = sshll.u32 %s2370, 4
          %s2386 = int_to_ptr.vmem [resolvable:$true] %s2385
          %2391 = dma.vmem_to_hbm [thread:$0]  %s2386, 256, %s2384, %s2367, 128, 128, 8
        $region56: #{tpu_custom_call.1} parent=51 // pred_fallthru
          _
        // Predicated region
        $region57: #{tpu_custom_call.1} parent=51 // pred_check
          %p2392 = pneg %p259
        $region58: #{tpu_custom_call.1} parent=51 // pred_check_branch
          %2394 = sbr.rel (%p2392) target = $region60
        $region59: #{tpu_custom_call.1} parent=51 // pred_region
          %s2396 = ssub.s32 256, 256
          %2397 = vsyncadd %s2372, %s2396
          %s2398 = smul.addr %s27, 2
          %s2399 = smul.addr %s2398, 128
          %s2400 = scalar_lea.hbm %s9, %s2399
          %s2401 = sshll.u32 %s2375, 4
          %s2402 = int_to_ptr.vmem [resolvable:$true] %s2401
          %2407 = dma.vmem_to_hbm [thread:$0]  %s2402, 256, %s2400, %s2372, 128, 128, 8
        $region60: #{tpu_custom_call.1} parent=51 // pred_fallthru
          _
      $region52: #{tpu_custom_call.1} parent=5 // pred_fallthru
        _
      %p2408 = scmp.le.s32.totalorder 2, %s22
      // Predicated region
      $region61: #{tpu_custom_call.1} parent=5 // pred_check
        %p2409 = pneg %p2408
      $region62: #{tpu_custom_call.1} parent=5 // pred_check_branch
        %2411 = sbr.rel (%p2409) target = $region64
      $region63: #{tpu_custom_call.1} parent=5 // pred_region
        %s2412 = ssub.s32 %s22, 2
        // Predicated region
        $region65: #{tpu_custom_call.1} parent=63 // pred_check
          %p2413 = pneg %p239
        $region66: #{tpu_custom_call.1} parent=63 // pred_check_branch
          %2415 = sbr.rel (%p2413) target = $region68
        $region67: #{tpu_custom_call.1} parent=63 // pred_region
          %s2416 = sand.u32 %s224, 1
          %s2417 = scalar_lea.sflag [#allocation3], %s2416
          %s2418 = sand.u32 %s224, 1
          %s2419 = smul.addr %s2418, 16
          %s2420 = scalar_lea.vmem [#allocation2], %s2419
          %2421 = dma.done %s2417, 256
        $region68: #{tpu_custom_call.1} parent=63 // pred_fallthru
          _
        // Predicated region
        $region69: #{tpu_custom_call.1} parent=63 // pred_check
          %p2422 = pneg %p265
        $region70: #{tpu_custom_call.1} parent=63 // pred_check_branch
          %2424 = sbr.rel (%p2422) target = $region72
        $region71: #{tpu_custom_call.1} parent=63 // pred_region
          %s2425 = sand.u32 %s250, 1
          %s2426 = scalar_lea.sflag [#allocation5], %s2425
          %s2427 = sand.u32 %s250, 1
          %s2428 = smul.addr %s2427, 16
          %s2429 = scalar_lea.vmem [#allocation4], %s2428
          %2430 = dma.done %s2426, 256
        $region72: #{tpu_custom_call.1} parent=63 // pred_fallthru
          _
      $region64: #{tpu_custom_call.1} parent=5 // pred_fallthru
        _
    $region6: #{tpu_custom_call.1} parent=1 // loop_footer
      %s26 = sadd.s32 1, %s22
    $region7: #{tpu_custom_call.1} parent=1 // loop_footer_branch
      %21 = sbr.rel target = $region3
    $region8: #{tpu_custom_call.1} parent=1 // loop_exit
      _
    %2431 = vsyncpa [#allocation3], 1
    %s2432 = scalar_lea.sflag [#allocation3], 1
    %2433 = vsyncpa %s2432, 1
    %2434 = vsyncpa [#allocation5], 1
    %s2435 = scalar_lea.sflag [#allocation5], 1
    %2436 = vsyncpa %s2435, 1

</llo_original>
